<compile_context>
chip_gen: v6e
topology: v6e:2x2x1
jax: 0.10.0
libtpu: 0.0.40
codegen_flags: <defaults>
</compile_context>

<pallas_src>
import functools

import numpy as np
import jax
import jax.numpy as jnp
from jax import lax
from jax.experimental import pallas as pl
from jax.experimental.pallas import tpu as pltpu


LN_EPS = 1e-5  # PyTorch nn.LayerNorm default


def fitness_block_kernel(x_ref, m_ref, w1_ref, g1_ref, b1_ref,
                         w2_ref, g2_ref, b2_ref, w3_ref, out_ref,
                         *, W, HWp, Nb, inv_n1, inv_n2, residual):
    L = Nb * HWp
    x = x_ref[0]                      # (Cin, L) f32
    masks = m_ref[...]                # (9, L)  f32 {0,1}, lane-only validity

    def conv3x3(inp, w_ref):
        # Stack the 9 shifted+masked taps along sublanes and do a single MXU
        # dot: (Cout, 9*Cin) x (9*Cin, L).  Any lane whose rolled source falls
        # outside its own HxW slab (batch / padding / wraparound boundary) is
        # masked to zero for that tap, so rolling the whole Nb*HWp axis is safe.
        taps = []
        for kh in range(3):
            for kw in range(3):
                t = kh * 3 + kw
                s = (kh - 1) * W + (kw - 1)
                shifted = inp if s == 0 else pltpu.roll(inp, shift=(-s) % L, axis=1)
                taps.append(shifted * masks[t:t + 1, :])
        stacked = jnp.concatenate(taps, axis=0).astype(w_ref.dtype)
        return jnp.dot(w_ref[...], stacked, preferred_element_type=jnp.float32)

    def layernorm(v, g, b, inv_n):
        # LayerNorm over [C, H, W] per batch element; single-pass statistics.
        # Padded lanes hold exact zeros (masked conv output, zero-padded
        # gamma/beta), so they neither perturb the stats (inv_n uses the true
        # element count) nor the normalized output.
        chunks = []
        for i in range(Nb):
            vi = v[:, i * HWp:(i + 1) * HWp]
            mu = jnp.sum(vi, keepdims=True) * inv_n
            var = jnp.sum(vi * vi, keepdims=True) * inv_n - mu * mu
            chunks.append((vi - mu) * lax.rsqrt(var + LN_EPS) * g + b)
        return chunks[0] if Nb == 1 else jnp.concatenate(chunks, axis=1)

    # conv_block1: conv3x3 (Cin->Cin) -> LayerNorm -> ReLU
    h1 = conv3x3(x, w1_ref)
    h1 = jnp.maximum(layernorm(h1, g1_ref[...], b1_ref[...], inv_n1), 0.0)

    # conv_block2: conv3x3 (Cin->Cout) -> LayerNorm
    h2 = conv3x3(h1, w2_ref)
    h2 = layernorm(h2, g2_ref[...], b2_ref[...], inv_n2)

    # conv_block3 (residual): 1x1 conv on the original input
    if residual:
        h2 = h2 + jnp.dot(w3_ref[...], x.astype(w3_ref.dtype),
                          preferred_element_type=jnp.float32)

    out_ref[0] = jnp.maximum(h2, 0.0)


def _round_up(v, m):
    return (v + m - 1) // m * m


def _choose_nb(B, c_max, hwp, target_bytes=512 * 1024):
    """Largest divisor of B whose per-step (C, Nb*HWp) slab stays <= ~0.5 MiB."""
    nb = 1
    for cand in range(1, B + 1):
        if B % cand == 0 and cand * c_max * hwp * 4 <= target_bytes:
            nb = cand
    return nb


def _build_masks(H, W, HWp, Nb):
    """(9, Nb*HWp) f32 tap-validity masks; zero on the lane-padding region."""
    HW = H * W
    p = np.arange(HW)
    hh, ww = p // W, p % W
    m = np.zeros((9, HWp), np.float32)
    for kh in range(3):
        for kw in range(3):
            valid = ((hh + kh - 1 >= 0) & (hh + kh - 1 < H) &
                     (ww + kw - 1 >= 0) & (ww + kw - 1 < W))
            m[kh * 3 + kw, :HW] = valid.astype(np.float32)
    return np.tile(m, (1, Nb))


def fitness_resnet_block(x, params, *, H, W, residual=True,
                         mxu_dtype=jnp.float32):
    """x: (B, Cin, H, W) float32 NCHW.  Returns (B, Cout, H, W).

    mxu_dtype=jnp.bfloat16 is recommended on v6e/v7x when the accuracy budget
    allows; LayerNorm / residual-add / ReLU stay in f32 regardless.
    """
    B, Cin = x.shape[0], x.shape[1]
    Cout = params["conv2_w"].shape[0]
    HW = H * W
    HWp = _round_up(HW, 128)                       # lane-dense spatial axis
    Nb = _choose_nb(B, max(Cin, Cout), HWp)        # batch elems folded into lanes
    G = B // Nb
    L = Nb * HWp

    # ---- host-side layout plumbing: pad lanes, fold Nb into the lane axis ----
    x2 = x.reshape(B, Cin, HW)
    if HWp != HW:
        x2 = jnp.pad(x2, ((0, 0), (0, 0), (0, HWp - HW)))
    x2 = x2.reshape(G, Nb, Cin, HWp).transpose(0, 2, 1, 3).reshape(G, Cin, L)

    def pad_ln(a, C):
        a = a.reshape(C, HW)
        return jnp.pad(a, ((0, 0), (0, HWp - HW))) if HWp != HW else a

    # conv weights (co, ci, kh, kw) -> (co, 9*ci); tap index kh*3+kw, ci fastest
    w1f = jnp.transpose(params["conv1_w"], (0, 2, 3, 1)).reshape(Cin, 9 * Cin)
    w2f = jnp.transpose(params["conv2_w"], (0, 2, 3, 1)).reshape(Cout, 9 * Cin)
    if residual:
        w3m = params["conv3_w"].reshape(Cout, Cin)
    else:
        w3m = jnp.zeros((Cout, Cin), jnp.float32)
    w1f, w2f, w3m = (w.astype(mxu_dtype) for w in (w1f, w2f, w3m))

    g1, b1 = pad_ln(params["ln1_w"], Cin), pad_ln(params["ln1_b"], Cin)
    g2, b2 = pad_ln(params["ln2_w"], Cout), pad_ln(params["ln2_b"], Cout)
    masks = jnp.asarray(_build_masks(H, W, HWp, Nb))

    kernel = functools.partial(
        fitness_block_kernel, W=W, HWp=HWp, Nb=Nb,
        inv_n1=1.0 / (Cin * HW), inv_n2=1.0 / (Cout * HW),
        residual=residual)

    rep = lambda i: (0, 0)                         # weights / masks: replicated
    out = pl.pallas_call(
        kernel,
        out_shape=jax.ShapeDtypeStruct((G, Cout, L), jnp.float32),
        grid=(G,),
        in_specs=[
            pl.BlockSpec((1, Cin, L), lambda i: (i, 0, 0)),   # x block (Nb elems)
            pl.BlockSpec((9, L), rep),                        # tap masks
            pl.BlockSpec((Cin, 9 * Cin), rep),                # conv1 weights
            pl.BlockSpec((Cin, HWp), rep),                    # ln1 gamma
            pl.BlockSpec((Cin, HWp), rep),                    # ln1 beta
            pl.BlockSpec((Cout, 9 * Cin), rep),               # conv2 weights
            pl.BlockSpec((Cout, HWp), rep),                   # ln2 gamma
            pl.BlockSpec((Cout, HWp), rep),                   # ln2 beta
            pl.BlockSpec((Cout, Cin), rep),                   # conv3 (1x1)
        ],
        out_specs=pl.BlockSpec((1, Cout, L), lambda i: (i, 0, 0)),
        compiler_params=pltpu.CompilerParams(
            dimension_semantics=("parallel",),
            vmem_limit_bytes=32 * 1024 * 1024),
    )(x2, masks, w1f, g1, b1, w2f, g2, b2, w3m)

    out = (out.reshape(G, Cout, Nb, HWp).transpose(0, 2, 1, 3)
              .reshape(B, Cout, HWp)[:, :, :HW].reshape(B, Cout, H, W))
    return out


# ------------------------- pure-JAX reference ------------------------------
def ref_forward(x, params):
    def conv(x, w, pad):
        return lax.conv_general_dilated(
            x, w, (1, 1), [(pad, pad), (pad, pad)],
            dimension_numbers=("NCHW", "OIHW", "NCHW"),
            precision=lax.Precision.HIGHEST)

    def ln(v, g, b):
        mu = v.mean(axis=(1, 2, 3), keepdims=True)
        var = ((v - mu) ** 2).mean(axis=(1, 2, 3), keepdims=True)
        return (v - mu) * lax.rsqrt(var + LN_EPS) * g[None] + b[None]

    h = jax.nn.relu(ln(conv(x, params["conv1_w"], 1),
                       params["ln1_w"], params["ln1_b"]))
    h = ln(conv(h, params["conv2_w"], 1), params["ln2_w"], params["ln2_b"])
    h = h + conv(x, params["conv3_w"], 0)
    return jax.nn.relu(h)


def init_params(key, cin, cout, H, W):
    ks = jax.random.split(key, 7)

    def conv_init(k, shape):
        fan_in = shape[1] * shape[2] * shape[3]
        bound = 1.0 / np.sqrt(fan_in)
        return jax.random.uniform(k, shape, jnp.float32, -bound, bound)

    return {
        "conv1_w": conv_init(ks[0], (cin, cin, 3, 3)),
        "conv2_w": conv_init(ks[1], (cout, cin, 3, 3)),
        "conv3_w": conv_init(ks[2], (cout, cin, 1, 1)),
        # LayerNorm affine params (perturb slightly so the affine path is
        # actually exercised; still deterministic).
        "ln1_w": 1.0 + 0.1 * jax.random.normal(ks[3], (cin, H, W), jnp.float32),
        "ln1_b": 0.1 * jax.random.normal(ks[4], (cin, H, W), jnp.float32),
        "ln2_w": 1.0 + 0.1 * jax.random.normal(ks[5], (cout, H, W), jnp.float32),
        "ln2_b": 0.1 * jax.random.normal(ks[6], (cout, H, W), jnp.float32),
    }


if __name__ == "__main__":
    B, Cin, Cout, H, W = 2, 8, 8, 16, 16
    key = jax.random.PRNGKey(0)
    kx, kp = jax.random.split(key)
    x = jax.random.normal(kx, (B, Cin, H, W), jnp.float32)
    params = init_params(kp, Cin, Cout, H, W)

    out = jax.block_until_ready(fitness_resnet_block(x, params, H=H, W=W))

    ref = jax.block_until_ready(ref_forward(x, params))
    np.testing.assert_allclose(np.asarray(out), np.asarray(ref),
                               atol=5e-3, rtol=5e-3)
    print("KERNEL_OK")
</pallas_src>

<mosaic_0001>
module attributes {stable_mosaic.version = 11 : i64} {
  func.func @fitness_block_kernel(%arg0: i32, %arg1: memref<1x8x512xf32, #tpu.memory_space<vmem>>, %arg2: memref<9x512xf32, #tpu.memory_space<vmem>>, %arg3: memref<8x72xf32, #tpu.memory_space<vmem>>, %arg4: memref<8x256xf32, #tpu.memory_space<vmem>>, %arg5: memref<8x256xf32, #tpu.memory_space<vmem>>, %arg6: memref<8x72xf32, #tpu.memory_space<vmem>>, %arg7: memref<8x256xf32, #tpu.memory_space<vmem>>, %arg8: memref<8x256xf32, #tpu.memory_space<vmem>>, %arg9: memref<8x8xf32, #tpu.memory_space<vmem>>, %arg10: memref<1x8x512xf32, #tpu.memory_space<vmem>>) attributes {dimension_semantics = [#tpu.dimension_semantics<parallel>], iteration_bounds = array<i64: 1>, scalar_prefetch = 0 : i64, scratch_operands = 0 : i64, tpu.core_type = #tpu.core_type<tc>, window_params = [{transform_indices = @transform_0, window_bounds = array<i64: 1, 8, 512>}, {pipeline_mode = #tpu.pipeline_mode<synchronous>, transform_indices = @transform_1, window_bounds = array<i64: 9, 512>}, {pipeline_mode = #tpu.pipeline_mode<synchronous>, transform_indices = @transform_2, window_bounds = array<i64: 8, 72>}, {pipeline_mode = #tpu.pipeline_mode<synchronous>, transform_indices = @transform_3, window_bounds = array<i64: 8, 256>}, {pipeline_mode = #tpu.pipeline_mode<synchronous>, transform_indices = @transform_4, window_bounds = array<i64: 8, 256>}, {pipeline_mode = #tpu.pipeline_mode<synchronous>, transform_indices = @transform_5, window_bounds = array<i64: 8, 72>}, {pipeline_mode = #tpu.pipeline_mode<synchronous>, transform_indices = @transform_6, window_bounds = array<i64: 8, 256>}, {pipeline_mode = #tpu.pipeline_mode<synchronous>, transform_indices = @transform_7, window_bounds = array<i64: 8, 256>}, {pipeline_mode = #tpu.pipeline_mode<synchronous>, transform_indices = @transform_8, window_bounds = array<i64: 8, 8>}, {transform_indices = @transform_9, window_bounds = array<i64: 1, 8, 512>}]} {
    %c0 = arith.constant 0 : index
    %c0_0 = arith.constant 0 : index
    %c0_1 = arith.constant 0 : index
    %0 = vector.load %arg1[%c0, %c0_0, %c0_1] : memref<1x8x512xf32, #tpu.memory_space<vmem>>, vector<1x8x512xf32>
    %1 = vector.shape_cast %0 : vector<1x8x512xf32> to vector<8x512xf32>
    %c0_2 = arith.constant 0 : index
    %c0_3 = arith.constant 0 : index
    %2 = vector.load %arg2[%c0_2, %c0_3] : memref<9x512xf32, #tpu.memory_space<vmem>>, vector<9x512xf32>
    %c17_i32 = arith.constant 17 : i32
    %3 = tpu.dynamic_rotate %1 by %c17_i32 dim 1 : vector<8x512xf32>, i32 -> vector<8x512xf32>
    %4 = vector.extract_strided_slice %2 {offsets = [0, 0], sizes = [1, 512], strides = [1, 1]} : vector<9x512xf32> to vector<1x512xf32>
    %5 = vector.broadcast %4 : vector<1x512xf32> to vector<8x512xf32>
    %6 = arith.mulf %3, %5 : vector<8x512xf32>
    %c16_i32 = arith.constant 16 : i32
    %7 = tpu.dynamic_rotate %1 by %c16_i32 dim 1 : vector<8x512xf32>, i32 -> vector<8x512xf32>
    %8 = vector.extract_strided_slice %2 {offsets = [1, 0], sizes = [1, 512], strides = [1, 1]} : vector<9x512xf32> to vector<1x512xf32>
    %9 = vector.broadcast %8 : vector<1x512xf32> to vector<8x512xf32>
    %10 = arith.mulf %7, %9 : vector<8x512xf32>
    %c15_i32 = arith.constant 15 : i32
    %11 = tpu.dynamic_rotate %1 by %c15_i32 dim 1 : vector<8x512xf32>, i32 -> vector<8x512xf32>
    %12 = vector.extract_strided_slice %2 {offsets = [2, 0], sizes = [1, 512], strides = [1, 1]} : vector<9x512xf32> to vector<1x512xf32>
    %13 = vector.broadcast %12 : vector<1x512xf32> to vector<8x512xf32>
    %14 = arith.mulf %11, %13 : vector<8x512xf32>
    %c1_i32 = arith.constant 1 : i32
    %15 = tpu.dynamic_rotate %1 by %c1_i32 dim 1 : vector<8x512xf32>, i32 -> vector<8x512xf32>
    %16 = vector.extract_strided_slice %2 {offsets = [3, 0], sizes = [1, 512], strides = [1, 1]} : vector<9x512xf32> to vector<1x512xf32>
    %17 = vector.broadcast %16 : vector<1x512xf32> to vector<8x512xf32>
    %18 = arith.mulf %15, %17 : vector<8x512xf32>
    %19 = vector.extract_strided_slice %2 {offsets = [4, 0], sizes = [1, 512], strides = [1, 1]} : vector<9x512xf32> to vector<1x512xf32>
    %20 = vector.broadcast %19 : vector<1x512xf32> to vector<8x512xf32>
    %21 = arith.mulf %1, %20 : vector<8x512xf32>
    %c511_i32 = arith.constant 511 : i32
    %22 = tpu.dynamic_rotate %1 by %c511_i32 dim 1 : vector<8x512xf32>, i32 -> vector<8x512xf32>
    %23 = vector.extract_strided_slice %2 {offsets = [5, 0], sizes = [1, 512], strides = [1, 1]} : vector<9x512xf32> to vector<1x512xf32>
    %24 = vector.broadcast %23 : vector<1x512xf32> to vector<8x512xf32>
    %25 = arith.mulf %22, %24 : vector<8x512xf32>
    %c497_i32 = arith.constant 497 : i32
    %26 = tpu.dynamic_rotate %1 by %c497_i32 dim 1 : vector<8x512xf32>, i32 -> vector<8x512xf32>
    %27 = vector.extract_strided_slice %2 {offsets = [6, 0], sizes = [1, 512], strides = [1, 1]} : vector<9x512xf32> to vector<1x512xf32>
    %28 = vector.broadcast %27 : vector<1x512xf32> to vector<8x512xf32>
    %29 = arith.mulf %26, %28 : vector<8x512xf32>
    %c496_i32 = arith.constant 496 : i32
    %30 = tpu.dynamic_rotate %1 by %c496_i32 dim 1 : vector<8x512xf32>, i32 -> vector<8x512xf32>
    %31 = vector.extract_strided_slice %2 {offsets = [7, 0], sizes = [1, 512], strides = [1, 1]} : vector<9x512xf32> to vector<1x512xf32>
    %32 = vector.broadcast %31 : vector<1x512xf32> to vector<8x512xf32>
    %33 = arith.mulf %30, %32 : vector<8x512xf32>
    %c495_i32 = arith.constant 495 : i32
    %34 = tpu.dynamic_rotate %1 by %c495_i32 dim 1 : vector<8x512xf32>, i32 -> vector<8x512xf32>
    %35 = vector.extract_strided_slice %2 {offsets = [8, 0], sizes = [1, 512], strides = [1, 1]} : vector<9x512xf32> to vector<1x512xf32>
    %36 = vector.broadcast %35 : vector<1x512xf32> to vector<8x512xf32>
    %37 = arith.mulf %34, %36 : vector<8x512xf32>
    %38 = tpu.concatenate %6, %10, %14, %18, %21, %25, %29, %33, %37 in 0 : vector<8x512xf32>, vector<8x512xf32>, vector<8x512xf32>, vector<8x512xf32>, vector<8x512xf32>, vector<8x512xf32>, vector<8x512xf32>, vector<8x512xf32>, vector<8x512xf32> -> vector<72x512xf32>
    %c0_4 = arith.constant 0 : index
    %c0_5 = arith.constant 0 : index
    %39 = vector.load %arg3[%c0_4, %c0_5] : memref<8x72xf32, #tpu.memory_space<vmem>>, vector<8x72xf32>
    %cst = arith.constant dense<0.000000e+00> : vector<8x512xf32>
    %40 = tpu.matmul %39, %38, %cst {dimension_numbers = #tpu.dot_dimension_numbers<[1], [0], [0], [1], [0, 0, 1, 1], [], []>} : vector<8x72xf32>, vector<72x512xf32>, vector<8x512xf32> -> vector<8x512xf32>
    %c0_6 = arith.constant 0 : index
    %c0_7 = arith.constant 0 : index
    %41 = vector.load %arg4[%c0_6, %c0_7] : memref<8x256xf32, #tpu.memory_space<vmem>>, vector<8x256xf32>
    %c0_8 = arith.constant 0 : index
    %c0_9 = arith.constant 0 : index
    %42 = vector.load %arg5[%c0_8, %c0_9] : memref<8x256xf32, #tpu.memory_space<vmem>>, vector<8x256xf32>
    %43 = vector.extract_strided_slice %40 {offsets = [0, 0], sizes = [8, 256], strides = [1, 1]} : vector<8x512xf32> to vector<8x256xf32>
    %44 = vector.shape_cast %43 : vector<8x256xf32> to vector<1x8x256xf32>
    %cst_10 = arith.constant dense<0.000000e+00> : vector<1xf32>
    %45 = vector.multi_reduction <add>, %44, %cst_10 [1, 2] : vector<1x8x256xf32> to vector<1xf32>
    %46 = vector.shape_cast %45 : vector<1xf32> to vector<1x1x1xf32>
    %47 = vector.extract %46[0, 0, 0] : f32 from vector<1x1x1xf32>
    %48 = vector.broadcast %47 : f32 to vector<1x1xf32>
    %cst_11 = arith.constant 4.8828125E-4 : f32
    %49 = vector.broadcast %cst_11 : f32 to vector<1x1xf32>
    %50 = arith.mulf %48, %49 : vector<1x1xf32>
    %51 = arith.mulf %43, %43 : vector<8x256xf32>
    %52 = vector.shape_cast %51 : vector<8x256xf32> to vector<1x8x256xf32>
    %cst_12 = arith.constant dense<0.000000e+00> : vector<1xf32>
    %53 = vector.multi_reduction <add>, %52, %cst_12 [1, 2] : vector<1x8x256xf32> to vector<1xf32>
    %54 = vector.shape_cast %53 : vector<1xf32> to vector<1x1x1xf32>
    %55 = vector.extract %54[0, 0, 0] : f32 from vector<1x1x1xf32>
    %56 = vector.broadcast %55 : f32 to vector<1x1xf32>
    %cst_13 = arith.constant 4.8828125E-4 : f32
    %57 = vector.broadcast %cst_13 : f32 to vector<1x1xf32>
    %58 = arith.mulf %56, %57 : vector<1x1xf32>
    %59 = arith.mulf %50, %50 : vector<1x1xf32>
    %60 = arith.subf %58, %59 : vector<1x1xf32>
    %61 = vector.broadcast %50 : vector<1x1xf32> to vector<8x256xf32>
    %62 = arith.subf %43, %61 : vector<8x256xf32>
    %cst_14 = arith.constant 9.99999974E-6 : f32
    %63 = vector.broadcast %cst_14 : f32 to vector<1x1xf32>
    %64 = arith.addf %60, %63 : vector<1x1xf32>
    %65 = math.rsqrt %64 : vector<1x1xf32>
    %66 = vector.broadcast %65 : vector<1x1xf32> to vector<8x256xf32>
    %67 = arith.mulf %62, %66 : vector<8x256xf32>
    %68 = arith.mulf %67, %41 : vector<8x256xf32>
    %69 = arith.addf %68, %42 : vector<8x256xf32>
    %70 = vector.extract_strided_slice %40 {offsets = [0, 256], sizes = [8, 256], strides = [1, 1]} : vector<8x512xf32> to vector<8x256xf32>
    %71 = vector.shape_cast %70 : vector<8x256xf32> to vector<1x8x256xf32>
    %cst_15 = arith.constant dense<0.000000e+00> : vector<1xf32>
    %72 = vector.multi_reduction <add>, %71, %cst_15 [1, 2] : vector<1x8x256xf32> to vector<1xf32>
    %73 = vector.shape_cast %72 : vector<1xf32> to vector<1x1x1xf32>
    %74 = vector.extract %73[0, 0, 0] : f32 from vector<1x1x1xf32>
    %75 = vector.broadcast %74 : f32 to vector<1x1xf32>
    %cst_16 = arith.constant 4.8828125E-4 : f32
    %76 = vector.broadcast %cst_16 : f32 to vector<1x1xf32>
    %77 = arith.mulf %75, %76 : vector<1x1xf32>
    %78 = arith.mulf %70, %70 : vector<8x256xf32>
    %79 = vector.shape_cast %78 : vector<8x256xf32> to vector<1x8x256xf32>
    %cst_17 = arith.constant dense<0.000000e+00> : vector<1xf32>
    %80 = vector.multi_reduction <add>, %79, %cst_17 [1, 2] : vector<1x8x256xf32> to vector<1xf32>
    %81 = vector.shape_cast %80 : vector<1xf32> to vector<1x1x1xf32>
    %82 = vector.extract %81[0, 0, 0] : f32 from vector<1x1x1xf32>
    %83 = vector.broadcast %82 : f32 to vector<1x1xf32>
    %cst_18 = arith.constant 4.8828125E-4 : f32
    %84 = vector.broadcast %cst_18 : f32 to vector<1x1xf32>
    %85 = arith.mulf %83, %84 : vector<1x1xf32>
    %86 = arith.mulf %77, %77 : vector<1x1xf32>
    %87 = arith.subf %85, %86 : vector<1x1xf32>
    %88 = vector.broadcast %77 : vector<1x1xf32> to vector<8x256xf32>
    %89 = arith.subf %70, %88 : vector<8x256xf32>
    %cst_19 = arith.constant 9.99999974E-6 : f32
    %90 = vector.broadcast %cst_19 : f32 to vector<1x1xf32>
    %91 = arith.addf %87, %90 : vector<1x1xf32>
    %92 = math.rsqrt %91 : vector<1x1xf32>
    %93 = vector.broadcast %92 : vector<1x1xf32> to vector<8x256xf32>
    %94 = arith.mulf %89, %93 : vector<8x256xf32>
    %95 = arith.mulf %94, %41 : vector<8x256xf32>
    %96 = arith.addf %95, %42 : vector<8x256xf32>
    %97 = tpu.concatenate %69, %96 in 1 : vector<8x256xf32>, vector<8x256xf32> -> vector<8x512xf32>
    %cst_20 = arith.constant 0.000000e+00 : f32
    %98 = vector.broadcast %cst_20 : f32 to vector<8x512xf32>
    %99 = arith.maximumf %97, %98 : vector<8x512xf32>
    %c17_i32_21 = arith.constant 17 : i32
    %100 = tpu.dynamic_rotate %99 by %c17_i32_21 dim 1 : vector<8x512xf32>, i32 -> vector<8x512xf32>
    %101 = vector.extract_strided_slice %2 {offsets = [0, 0], sizes = [1, 512], strides = [1, 1]} : vector<9x512xf32> to vector<1x512xf32>
    %102 = vector.broadcast %101 : vector<1x512xf32> to vector<8x512xf32>
    %103 = arith.mulf %100, %102 : vector<8x512xf32>
    %c16_i32_22 = arith.constant 16 : i32
    %104 = tpu.dynamic_rotate %99 by %c16_i32_22 dim 1 : vector<8x512xf32>, i32 -> vector<8x512xf32>
    %105 = vector.extract_strided_slice %2 {offsets = [1, 0], sizes = [1, 512], strides = [1, 1]} : vector<9x512xf32> to vector<1x512xf32>
    %106 = vector.broadcast %105 : vector<1x512xf32> to vector<8x512xf32>
    %107 = arith.mulf %104, %106 : vector<8x512xf32>
    %c15_i32_23 = arith.constant 15 : i32
    %108 = tpu.dynamic_rotate %99 by %c15_i32_23 dim 1 : vector<8x512xf32>, i32 -> vector<8x512xf32>
    %109 = vector.extract_strided_slice %2 {offsets = [2, 0], sizes = [1, 512], strides = [1, 1]} : vector<9x512xf32> to vector<1x512xf32>
    %110 = vector.broadcast %109 : vector<1x512xf32> to vector<8x512xf32>
    %111 = arith.mulf %108, %110 : vector<8x512xf32>
    %c1_i32_24 = arith.constant 1 : i32
    %112 = tpu.dynamic_rotate %99 by %c1_i32_24 dim 1 : vector<8x512xf32>, i32 -> vector<8x512xf32>
    %113 = vector.extract_strided_slice %2 {offsets = [3, 0], sizes = [1, 512], strides = [1, 1]} : vector<9x512xf32> to vector<1x512xf32>
    %114 = vector.broadcast %113 : vector<1x512xf32> to vector<8x512xf32>
    %115 = arith.mulf %112, %114 : vector<8x512xf32>
    %116 = vector.extract_strided_slice %2 {offsets = [4, 0], sizes = [1, 512], strides = [1, 1]} : vector<9x512xf32> to vector<1x512xf32>
    %117 = vector.broadcast %116 : vector<1x512xf32> to vector<8x512xf32>
    %118 = arith.mulf %99, %117 : vector<8x512xf32>
    %c511_i32_25 = arith.constant 511 : i32
    %119 = tpu.dynamic_rotate %99 by %c511_i32_25 dim 1 : vector<8x512xf32>, i32 -> vector<8x512xf32>
    %120 = vector.extract_strided_slice %2 {offsets = [5, 0], sizes = [1, 512], strides = [1, 1]} : vector<9x512xf32> to vector<1x512xf32>
    %121 = vector.broadcast %120 : vector<1x512xf32> to vector<8x512xf32>
    %122 = arith.mulf %119, %121 : vector<8x512xf32>
    %c497_i32_26 = arith.constant 497 : i32
    %123 = tpu.dynamic_rotate %99 by %c497_i32_26 dim 1 : vector<8x512xf32>, i32 -> vector<8x512xf32>
    %124 = vector.extract_strided_slice %2 {offsets = [6, 0], sizes = [1, 512], strides = [1, 1]} : vector<9x512xf32> to vector<1x512xf32>
    %125 = vector.broadcast %124 : vector<1x512xf32> to vector<8x512xf32>
    %126 = arith.mulf %123, %125 : vector<8x512xf32>
    %c496_i32_27 = arith.constant 496 : i32
    %127 = tpu.dynamic_rotate %99 by %c496_i32_27 dim 1 : vector<8x512xf32>, i32 -> vector<8x512xf32>
    %128 = vector.extract_strided_slice %2 {offsets = [7, 0], sizes = [1, 512], strides = [1, 1]} : vector<9x512xf32> to vector<1x512xf32>
    %129 = vector.broadcast %128 : vector<1x512xf32> to vector<8x512xf32>
    %130 = arith.mulf %127, %129 : vector<8x512xf32>
    %c495_i32_28 = arith.constant 495 : i32
    %131 = tpu.dynamic_rotate %99 by %c495_i32_28 dim 1 : vector<8x512xf32>, i32 -> vector<8x512xf32>
    %132 = vector.extract_strided_slice %2 {offsets = [8, 0], sizes = [1, 512], strides = [1, 1]} : vector<9x512xf32> to vector<1x512xf32>
    %133 = vector.broadcast %132 : vector<1x512xf32> to vector<8x512xf32>
    %134 = arith.mulf %131, %133 : vector<8x512xf32>
    %135 = tpu.concatenate %103, %107, %111, %115, %118, %122, %126, %130, %134 in 0 : vector<8x512xf32>, vector<8x512xf32>, vector<8x512xf32>, vector<8x512xf32>, vector<8x512xf32>, vector<8x512xf32>, vector<8x512xf32>, vector<8x512xf32>, vector<8x512xf32> -> vector<72x512xf32>
    %c0_29 = arith.constant 0 : index
    %c0_30 = arith.constant 0 : index
    %136 = vector.load %arg6[%c0_29, %c0_30] : memref<8x72xf32, #tpu.memory_space<vmem>>, vector<8x72xf32>
    %cst_31 = arith.constant dense<0.000000e+00> : vector<8x512xf32>
    %137 = tpu.matmul %136, %135, %cst_31 {dimension_numbers = #tpu.dot_dimension_numbers<[1], [0], [0], [1], [0, 0, 1, 1], [], []>} : vector<8x72xf32>, vector<72x512xf32>, vector<8x512xf32> -> vector<8x512xf32>
    %c0_32 = arith.constant 0 : index
    %c0_33 = arith.constant 0 : index
    %138 = vector.load %arg7[%c0_32, %c0_33] : memref<8x256xf32, #tpu.memory_space<vmem>>, vector<8x256xf32>
    %c0_34 = arith.constant 0 : index
    %c0_35 = arith.constant 0 : index
    %139 = vector.load %arg8[%c0_34, %c0_35] : memref<8x256xf32, #tpu.memory_space<vmem>>, vector<8x256xf32>
    %140 = vector.extract_strided_slice %137 {offsets = [0, 0], sizes = [8, 256], strides = [1, 1]} : vector<8x512xf32> to vector<8x256xf32>
    %141 = vector.shape_cast %140 : vector<8x256xf32> to vector<1x8x256xf32>
    %cst_36 = arith.constant dense<0.000000e+00> : vector<1xf32>
    %142 = vector.multi_reduction <add>, %141, %cst_36 [1, 2] : vector<1x8x256xf32> to vector<1xf32>
    %143 = vector.shape_cast %142 : vector<1xf32> to vector<1x1x1xf32>
    %144 = vector.extract %143[0, 0, 0] : f32 from vector<1x1x1xf32>
    %145 = vector.broadcast %144 : f32 to vector<1x1xf32>
    %cst_37 = arith.constant 4.8828125E-4 : f32
    %146 = vector.broadcast %cst_37 : f32 to vector<1x1xf32>
    %147 = arith.mulf %145, %146 : vector<1x1xf32>
    %148 = arith.mulf %140, %140 : vector<8x256xf32>
    %149 = vector.shape_cast %148 : vector<8x256xf32> to vector<1x8x256xf32>
    %cst_38 = arith.constant dense<0.000000e+00> : vector<1xf32>
    %150 = vector.multi_reduction <add>, %149, %cst_38 [1, 2] : vector<1x8x256xf32> to vector<1xf32>
    %151 = vector.shape_cast %150 : vector<1xf32> to vector<1x1x1xf32>
    %152 = vector.extract %151[0, 0, 0] : f32 from vector<1x1x1xf32>
    %153 = vector.broadcast %152 : f32 to vector<1x1xf32>
    %cst_39 = arith.constant 4.8828125E-4 : f32
    %154 = vector.broadcast %cst_39 : f32 to vector<1x1xf32>
    %155 = arith.mulf %153, %154 : vector<1x1xf32>
    %156 = arith.mulf %147, %147 : vector<1x1xf32>
    %157 = arith.subf %155, %156 : vector<1x1xf32>
    %158 = vector.broadcast %147 : vector<1x1xf32> to vector<8x256xf32>
    %159 = arith.subf %140, %158 : vector<8x256xf32>
    %cst_40 = arith.constant 9.99999974E-6 : f32
    %160 = vector.broadcast %cst_40 : f32 to vector<1x1xf32>
    %161 = arith.addf %157, %160 : vector<1x1xf32>
    %162 = math.rsqrt %161 : vector<1x1xf32>
    %163 = vector.broadcast %162 : vector<1x1xf32> to vector<8x256xf32>
    %164 = arith.mulf %159, %163 : vector<8x256xf32>
    %165 = arith.mulf %164, %138 : vector<8x256xf32>
    %166 = arith.addf %165, %139 : vector<8x256xf32>
    %167 = vector.extract_strided_slice %137 {offsets = [0, 256], sizes = [8, 256], strides = [1, 1]} : vector<8x512xf32> to vector<8x256xf32>
    %168 = vector.shape_cast %167 : vector<8x256xf32> to vector<1x8x256xf32>
    %cst_41 = arith.constant dense<0.000000e+00> : vector<1xf32>
    %169 = vector.multi_reduction <add>, %168, %cst_41 [1, 2] : vector<1x8x256xf32> to vector<1xf32>
    %170 = vector.shape_cast %169 : vector<1xf32> to vector<1x1x1xf32>
    %171 = vector.extract %170[0, 0, 0] : f32 from vector<1x1x1xf32>
    %172 = vector.broadcast %171 : f32 to vector<1x1xf32>
    %cst_42 = arith.constant 4.8828125E-4 : f32
    %173 = vector.broadcast %cst_42 : f32 to vector<1x1xf32>
    %174 = arith.mulf %172, %173 : vector<1x1xf32>
    %175 = arith.mulf %167, %167 : vector<8x256xf32>
    %176 = vector.shape_cast %175 : vector<8x256xf32> to vector<1x8x256xf32>
    %cst_43 = arith.constant dense<0.000000e+00> : vector<1xf32>
    %177 = vector.multi_reduction <add>, %176, %cst_43 [1, 2] : vector<1x8x256xf32> to vector<1xf32>
    %178 = vector.shape_cast %177 : vector<1xf32> to vector<1x1x1xf32>
    %179 = vector.extract %178[0, 0, 0] : f32 from vector<1x1x1xf32>
    %180 = vector.broadcast %179 : f32 to vector<1x1xf32>
    %cst_44 = arith.constant 4.8828125E-4 : f32
    %181 = vector.broadcast %cst_44 : f32 to vector<1x1xf32>
    %182 = arith.mulf %180, %181 : vector<1x1xf32>
    %183 = arith.mulf %174, %174 : vector<1x1xf32>
    %184 = arith.subf %182, %183 : vector<1x1xf32>
    %185 = vector.broadcast %174 : vector<1x1xf32> to vector<8x256xf32>
    %186 = arith.subf %167, %185 : vector<8x256xf32>
    %cst_45 = arith.constant 9.99999974E-6 : f32
    %187 = vector.broadcast %cst_45 : f32 to vector<1x1xf32>
    %188 = arith.addf %184, %187 : vector<1x1xf32>
    %189 = math.rsqrt %188 : vector<1x1xf32>
    %190 = vector.broadcast %189 : vector<1x1xf32> to vector<8x256xf32>
    %191 = arith.mulf %186, %190 : vector<8x256xf32>
    %192 = arith.mulf %191, %138 : vector<8x256xf32>
    %193 = arith.addf %192, %139 : vector<8x256xf32>
    %194 = tpu.concatenate %166, %193 in 1 : vector<8x256xf32>, vector<8x256xf32> -> vector<8x512xf32>
    %c0_46 = arith.constant 0 : index
    %c0_47 = arith.constant 0 : index
    %195 = vector.load %arg9[%c0_46, %c0_47] : memref<8x8xf32, #tpu.memory_space<vmem>>, vector<8x8xf32>
    %cst_48 = arith.constant dense<0.000000e+00> : vector<8x512xf32>
    %196 = tpu.matmul %195, %1, %cst_48 {dimension_numbers = #tpu.dot_dimension_numbers<[1], [0], [0], [1], [0, 0, 1, 1], [], []>} : vector<8x8xf32>, vector<8x512xf32>, vector<8x512xf32> -> vector<8x512xf32>
    %197 = arith.addf %194, %196 : vector<8x512xf32>
    %cst_49 = arith.constant 0.000000e+00 : f32
    %198 = vector.broadcast %cst_49 : f32 to vector<8x512xf32>
    %199 = arith.maximumf %197, %198 : vector<8x512xf32>
    %c0_50 = arith.constant 0 : index
    %c0_51 = arith.constant 0 : index
    %c0_52 = arith.constant 0 : index
    %200 = vector.load %arg10[%c0_50, %c0_51, %c0_52] : memref<1x8x512xf32, #tpu.memory_space<vmem>>, vector<1x8x512xf32>
    %201 = vector.shape_cast %200 : vector<1x8x512xf32> to vector<8x512xf32>
    %202 = vector.shape_cast %199 : vector<8x512xf32> to vector<1x8x512xf32>
    tpu.vector_store %arg10[%c0_50, %c0_51, %c0_52], %202 {strides = array<i32>} : memref<1x8x512xf32, #tpu.memory_space<vmem>>, vector<1x8x512xf32>,
    return
  }
  func.func @transform_0(%arg0: i32) -> (i32, i32, i32) {
    %c0_i32 = arith.constant 0 : i32
    %c0_i32_0 = arith.constant 0 : i32
    %c0_i32_1 = arith.constant 0 : i32
    return %arg0, %c0_i32, %c0_i32_0 : i32, i32, i32
  }
  func.func @transform_1(%arg0: i32) -> (i32, i32) {
    %c0_i32 = arith.constant 0 : i32
    %c0_i32_0 = arith.constant 0 : i32
    %c0_i32_1 = arith.constant 0 : i32
    return %c0_i32, %c0_i32_0 : i32, i32
  }
  func.func @transform_2(%arg0: i32) -> (i32, i32) {
    %c0_i32 = arith.constant 0 : i32
    %c0_i32_0 = arith.constant 0 : i32
    %c0_i32_1 = arith.constant 0 : i32
    return %c0_i32, %c0_i32_0 : i32, i32
  }
  func.func @transform_3(%arg0: i32) -> (i32, i32) {
    %c0_i32 = arith.constant 0 : i32
    %c0_i32_0 = arith.constant 0 : i32
    %c0_i32_1 = arith.constant 0 : i32
    return %c0_i32, %c0_i32_0 : i32, i32
  }
  func.func @transform_4(%arg0: i32) -> (i32, i32) {
    %c0_i32 = arith.constant 0 : i32
    %c0_i32_0 = arith.constant 0 : i32
    %c0_i32_1 = arith.constant 0 : i32
    return %c0_i32, %c0_i32_0 : i32, i32
  }
  func.func @transform_5(%arg0: i32) -> (i32, i32) {
    %c0_i32 = arith.constant 0 : i32
    %c0_i32_0 = arith.constant 0 : i32
    %c0_i32_1 = arith.constant 0 : i32
    return %c0_i32, %c0_i32_0 : i32, i32
  }
  func.func @transform_6(%arg0: i32) -> (i32, i32) {
    %c0_i32 = arith.constant 0 : i32
    %c0_i32_0 = arith.constant 0 : i32
    %c0_i32_1 = arith.constant 0 : i32
    return %c0_i32, %c0_i32_0 : i32, i32
  }
  func.func @transform_7(%arg0: i32) -> (i32, i32) {
    %c0_i32 = arith.constant 0 : i32
    %c0_i32_0 = arith.constant 0 : i32
    %c0_i32_1 = arith.constant 0 : i32
    return %c0_i32, %c0_i32_0 : i32, i32
  }
  func.func @transform_8(%arg0: i32) -> (i32, i32) {
    %c0_i32 = arith.constant 0 : i32
    %c0_i32_0 = arith.constant 0 : i32
    %c0_i32_1 = arith.constant 0 : i32
    return %c0_i32, %c0_i32_0 : i32, i32
  }
  func.func @transform_9(%arg0: i32) -> (i32, i32, i32) {
    %c0_i32 = arith.constant 0 : i32
    %c0_i32_0 = arith.constant 0 : i32
    %c0_i32_1 = arith.constant 0 : i32
    return %arg0, %c0_i32, %c0_i32_0 : i32, i32, i32
  }
}

</mosaic_0001>

<llo_original>
// kernel: tpu_custom_call.1
$region0: #{tpu_custom_call.1}
  #allocation0 [shape = 'u32[]', space=smem, size = 0x4, offset = 0x4, fixed_abs, tag = 'smem constant byte address 0x4 - core index']
  #allocation1 [shape = 'u32[144,128]{1,0:T(1,128)}', space=vmem, size = 0x12000, scoped, tag = 'internal scratch']
  %s0 = inlined_call_operand.hbm [shape: f32[1,8,512], index: 0, kind: input, shape index: {}]
  %s1 = inlined_call_operand.hbm [shape: f32[9,512], index: 1, kind: input, shape index: {}]
  %s2 = inlined_call_operand.hbm [shape: f32[8,72], index: 2, kind: input, shape index: {}]
  %s3 = inlined_call_operand.hbm [shape: f32[8,256], index: 3, kind: input, shape index: {}]
  %s4 = inlined_call_operand.hbm [shape: f32[8,256], index: 4, kind: input, shape index: {}]
  %s5 = inlined_call_operand.vmem [shape: f32[8,72], index: 5, kind: input, shape index: {}]
  %s6 = inlined_call_operand.hbm [shape: f32[8,256], index: 6, kind: input, shape index: {}]
  %s7 = inlined_call_operand.hbm [shape: f32[8,256], index: 7, kind: input, shape index: {}]
  %s8 = inlined_call_operand.hbm [shape: f32[8,8], index: 8, kind: input, shape index: {}]
  %s9 = inlined_call_operand.hbm [shape: f32[1,8,512], index: 9, kind: output, shape index: {}]
  %s10 = sld [smem:[#allocation0]]
  $region78: #{tpu_custom_call.1} parent=0
    _
  %s12 = ssub.s32 1, %s10
  %s13 = scalar_select 0, %s12, %s10
  $region1: #{tpu_custom_call.1} parent=0
    #allocation2 [shape = 'u8[16384]{0}', space=vmem, size = 0x4000, scoped, tag = 'input window, operand 0, single buffered']
    #allocation3 [shape = 's32[1]{0}', space=sflag, size = 0x4, scoped, tag = 'scoped memory for tpu_custom_call.1']
    #allocation4 [shape = 's32[1]{0}', space=sflag, size = 0x4, scoped, tag = 'scoped memory for tpu_custom_call.1']
    #allocation5 [shape = 'u8[32768]{0}', space=vmem, size = 0x8000, scoped, tag = 'input window, operand 1, single buffered']
    #allocation6 [shape = 's32[1]{0}', space=sflag, size = 0x4, scoped, tag = 'scoped memory for tpu_custom_call.1']
    #allocation7 [shape = 'u8[4096]{0}', space=vmem, size = 0x1000, scoped, tag = 'input window, operand 2, single buffered']
    #allocation8 [shape = 'u8[8192]{0}', space=vmem, size = 0x2000, scoped, tag = 'input window, operand 3, single buffered']
    #allocation9 [shape = 's32[1]{0}', space=sflag, size = 0x4, scoped, tag = 'scoped memory for tpu_custom_call.1']
    #allocation10 [shape = 'u8[8192]{0}', space=vmem, size = 0x2000, scoped, tag = 'input window, operand 4, single buffered']
    #allocation11 [shape = 'u8[8192]{0}', space=vmem, size = 0x2000, scoped, tag = 'input window, operand 6, single buffered']
    #allocation12 [shape = 's32[1]{0}', space=sflag, size = 0x4, scoped, tag = 'scoped memory for tpu_custom_call.1']
    #allocation13 [shape = 'u8[8192]{0}', space=vmem, size = 0x2000, scoped, tag = 'input window, operand 7, single buffered']
    #allocation14 [shape = 'u8[4096]{0}', space=vmem, size = 0x1000, scoped, tag = 'input window, operand 8, single buffered']
    #allocation15 [shape = 's32[1]{0}', space=sflag, size = 0x4, scoped, tag = 'scoped memory for tpu_custom_call.1']
    #allocation16 [shape = 'u8[16384]{0}', space=vmem, size = 0x4000, scoped, tag = 'output window, operand 0, single buffered']
    %14 = vsyncpa [#allocation3], 0
    %15 = vsyncpa [#allocation6], 0
    %16 = vsyncpa [#allocation9], 0
    %17 = vsyncpa [#allocation12], 0
    %18 = vsyncpa [#allocation15], 0
    %19 = vsyncpa [#allocation4], 0
    // Predicated region
    $region2: #{tpu_custom_call.1} parent=1 // pred_check
      _
    $region3: #{tpu_custom_call.1} parent=1 // pred_check_branch
      %21 = sbr.rel (0) target = $region5
    $region4: #{tpu_custom_call.1} parent=1 // pred_region
      %s23 = ssub.s32 512, 512
      %24 = vsyncadd [#allocation3], %s23
      %s26 = sshll.u32 [#allocation2], 4
      %s27 = int_to_ptr.vmem [resolvable:$true] %s26
      %29 = dma.hbm_to_vmem [thread:$0]  %s0, 512, %s27, [#allocation3]
    $region5: #{tpu_custom_call.1} parent=1 // pred_fallthru
      _
    // Predicated region
    $region6: #{tpu_custom_call.1} parent=1 // pred_check
      _
    $region7: #{tpu_custom_call.1} parent=1 // pred_check_branch
      %31 = sbr.rel (0) target = $region9
    $region8: #{tpu_custom_call.1} parent=1 // pred_region
      %s33 = ssub.s32 1024, 1024
      %34 = vsyncadd [#allocation6], %s33
      %s35 = sshll.u32 [#allocation5], 4
      %s36 = int_to_ptr.vmem [resolvable:$true] %s35
      %41 = dma.hbm_to_vmem [thread:$0]  %s1, 1024, %s36, [#allocation6], 512, 512, 32
    $region9: #{tpu_custom_call.1} parent=1 // pred_fallthru
      _
    // Predicated region
    $region10: #{tpu_custom_call.1} parent=1 // pred_check
      _
    $region11: #{tpu_custom_call.1} parent=1 // pred_check_branch
      %43 = sbr.rel (0) target = $region13
    $region12: #{tpu_custom_call.1} parent=1 // pred_region
      %s45 = ssub.s32 128, 128
      %46 = vsyncadd [#allocation6], %s45
      %s48 = sshll.u32 [#allocation7], 4
      %s49 = int_to_ptr.vmem [resolvable:$true] %s48
      %51 = dma.hbm_to_vmem [thread:$0]  %s2, 128, %s49, [#allocation6]
    $region13: #{tpu_custom_call.1} parent=1 // pred_fallthru
      _
    // Predicated region
    $region14: #{tpu_custom_call.1} parent=1 // pred_check
      _
    $region15: #{tpu_custom_call.1} parent=1 // pred_check_branch
      %53 = sbr.rel (0) target = $region17
    $region16: #{tpu_custom_call.1} parent=1 // pred_region
      %s55 = ssub.s32 256, 256
      %56 = vsyncadd [#allocation9], %s55
      %s58 = sshll.u32 [#allocation8], 4
      %s59 = int_to_ptr.vmem [resolvable:$true] %s58
      %61 = dma.hbm_to_vmem [thread:$0]  %s3, 256, %s59, [#allocation9]
    $region17: #{tpu_custom_call.1} parent=1 // pred_fallthru
      _
    // Predicated region
    $region18: #{tpu_custom_call.1} parent=1 // pred_check
      _
    $region19: #{tpu_custom_call.1} parent=1 // pred_check_branch
      %63 = sbr.rel (0) target = $region21
    $region20: #{tpu_custom_call.1} parent=1 // pred_region
      %s65 = ssub.s32 256, 256
      %66 = vsyncadd [#allocation9], %s65
      %s68 = sshll.u32 [#allocation10], 4
      %s69 = int_to_ptr.vmem [resolvable:$true] %s68
      %71 = dma.hbm_to_vmem [thread:$0]  %s4, 256, %s69, [#allocation9]
    $region21: #{tpu_custom_call.1} parent=1 // pred_fallthru
      _
    // Predicated region
    $region22: #{tpu_custom_call.1} parent=1 // pred_check
      _
    $region23: #{tpu_custom_call.1} parent=1 // pred_check_branch
      %73 = sbr.rel (0) target = $region25
    $region24: #{tpu_custom_call.1} parent=1 // pred_region
      _
    $region25: #{tpu_custom_call.1} parent=1 // pred_fallthru
      _
    // Predicated region
    $region26: #{tpu_custom_call.1} parent=1 // pred_check
      _
    $region27: #{tpu_custom_call.1} parent=1 // pred_check_branch
      %75 = sbr.rel (0) target = $region29
    $region28: #{tpu_custom_call.1} parent=1 // pred_region
      %s77 = ssub.s32 256, 256
      %78 = vsyncadd [#allocation12], %s77
      %s80 = sshll.u32 [#allocation11], 4
      %s81 = int_to_ptr.vmem [resolvable:$true] %s80
      %83 = dma.hbm_to_vmem [thread:$0]  %s6, 256, %s81, [#allocation12]
    $region29: #{tpu_custom_call.1} parent=1 // pred_fallthru
      _
    // Predicated region
    $region30: #{tpu_custom_call.1} parent=1 // pred_check
      _
    $region31: #{tpu_custom_call.1} parent=1 // pred_check_branch
      %85 = sbr.rel (0) target = $region33
    $region32: #{tpu_custom_call.1} parent=1 // pred_region
      %s87 = ssub.s32 256, 256
      %88 = vsyncadd [#allocation12], %s87
      %s90 = sshll.u32 [#allocation13], 4
      %s91 = int_to_ptr.vmem [resolvable:$true] %s90
      %93 = dma.hbm_to_vmem [thread:$0]  %s7, 256, %s91, [#allocation12]
    $region33: #{tpu_custom_call.1} parent=1 // pred_fallthru
      _
    // Predicated region
    $region34: #{tpu_custom_call.1} parent=1 // pred_check
      _
    $region35: #{tpu_custom_call.1} parent=1 // pred_check_branch
      %95 = sbr.rel (0) target = $region37
    $region36: #{tpu_custom_call.1} parent=1 // pred_region
      %s97 = ssub.s32 128, 128
      %98 = vsyncadd [#allocation15], %s97
      %s100 = sshll.u32 [#allocation14], 4
      %s101 = int_to_ptr.vmem [resolvable:$true] %s100
      %103 = dma.hbm_to_vmem [thread:$0]  %s8, 128, %s101, [#allocation15]
    $region37: #{tpu_custom_call.1} parent=1 // pred_fallthru
      _
    // Predicated region
    $region38: #{tpu_custom_call.1} parent=1 // pred_check
      _
    $region39: #{tpu_custom_call.1} parent=1 // pred_check_branch
      %105 = sbr.rel (0) target = $region41
    $region40: #{tpu_custom_call.1} parent=1 // pred_region
      %106 = dma.done [#allocation3], 512
    $region41: #{tpu_custom_call.1} parent=1 // pred_fallthru
      _
    // Predicated region
    $region42: #{tpu_custom_call.1} parent=1 // pred_check
      _
    $region43: #{tpu_custom_call.1} parent=1 // pred_check_branch
      %108 = sbr.rel (0) target = $region45
    $region44: #{tpu_custom_call.1} parent=1 // pred_region
      %109 = dma.done [#allocation6], 1024
    $region45: #{tpu_custom_call.1} parent=1 // pred_fallthru
      _
    // Predicated region
    $region46: #{tpu_custom_call.1} parent=1 // pred_check
      _
    $region47: #{tpu_custom_call.1} parent=1 // pred_check_branch
      %111 = sbr.rel (0) target = $region49
    $region48: #{tpu_custom_call.1} parent=1 // pred_region
      %112 = dma.done [#allocation6], 128
    $region49: #{tpu_custom_call.1} parent=1 // pred_fallthru
      _
    // Predicated region
    $region50: #{tpu_custom_call.1} parent=1 // pred_check
      _
    $region51: #{tpu_custom_call.1} parent=1 // pred_check_branch
      %114 = sbr.rel (0) target = $region53
    $region52: #{tpu_custom_call.1} parent=1 // pred_region
      %115 = dma.done [#allocation9], 256
    $region53: #{tpu_custom_call.1} parent=1 // pred_fallthru
      _
    // Predicated region
    $region54: #{tpu_custom_call.1} parent=1 // pred_check
      _
    $region55: #{tpu_custom_call.1} parent=1 // pred_check_branch
      %117 = sbr.rel (0) target = $region57
    $region56: #{tpu_custom_call.1} parent=1 // pred_region
      %118 = dma.done [#allocation9], 256
    $region57: #{tpu_custom_call.1} parent=1 // pred_fallthru
      _
    // Predicated region
    $region58: #{tpu_custom_call.1} parent=1 // pred_check
      _
    $region59: #{tpu_custom_call.1} parent=1 // pred_check_branch
      %120 = sbr.rel (0) target = $region61
    $region60: #{tpu_custom_call.1} parent=1 // pred_region
      %121 = dma.done [#allocation12], 256
    $region61: #{tpu_custom_call.1} parent=1 // pred_fallthru
      _
    // Predicated region
    $region62: #{tpu_custom_call.1} parent=1 // pred_check
      _
    $region63: #{tpu_custom_call.1} parent=1 // pred_check_branch
      %123 = sbr.rel (0) target = $region65
    $region64: #{tpu_custom_call.1} parent=1 // pred_region
      %124 = dma.done [#allocation12], 256
    $region65: #{tpu_custom_call.1} parent=1 // pred_fallthru
      _
    // Predicated region
    $region66: #{tpu_custom_call.1} parent=1 // pred_check
      _
    $region67: #{tpu_custom_call.1} parent=1 // pred_check_branch
      %126 = sbr.rel (0) target = $region69
    $region68: #{tpu_custom_call.1} parent=1 // pred_region
      %127 = dma.done [#allocation15], 128
    $region69: #{tpu_custom_call.1} parent=1 // pred_fallthru
      _
    %v128 = vld [vmem:[#allocation2] sm:$0xff]
    %v129 = vld [vmem:[#allocation2 + $0x8] sm:$0xff]
    %v130 = vld [vmem:[#allocation2 + $0x10] sm:$0xff]
    %v131 = vld [vmem:[#allocation2 + $0x18] sm:$0xff]
    %v132 = vld [vmem:[#allocation5] sm:$0xff]
    %v133 = vld [vmem:[#allocation5 + $0x8] sm:$0xff]
    %v134 = vld [vmem:[#allocation5 + $0x10] sm:$0xff]
    %v135 = vld [vmem:[#allocation5 + $0x18] sm:$0xff]
    %v136 = vld [vmem:[#allocation5 + $0x20] sm:$0x1]
    %v137 = vld [vmem:[#allocation5 + $0x28] sm:$0x1]
    %v138 = vld [vmem:[#allocation5 + $0x30] sm:$0x1]
    %v139 = vld [vmem:[#allocation5 + $0x38] sm:$0x1]
    %140 = vrot.lane.b32.xlu0 %v128, 17
    %v141 = vpop.permute.xlu0 %140
    %142 = vrot.lane.b32.xlu0 %v129, 17
    %v143 = vpop.permute.xlu0 %142
    %144 = vrot.lane.b32.xlu0 %v130, 17
    %v145 = vpop.permute.xlu0 %144
    %146 = vrot.lane.b32.xlu0 %v131, 17
    %v147 = vpop.permute.xlu0 %146
    %v148 = vlaneseq
    %v149 = vand.u32 %v148, 127
    %vm150 = vcmp.lt.s32.totalorder %v149, 17
    %v151 = vsel %vm150, %v145, %v147
    %v152 = vsel %vm150, %v143, %v145
    %v153 = vsel %vm150, %v141, %v143
    %v154 = vsel %vm150, %v147, %v141
    %v155 = vlaneseq
    %v156 = vshrl.u32 %v155, 7
    %v157 = vsub.s32 0, %v156
    %v158 = vrot.slane %v132, %v157
    %v159 = vlaneseq
    %v160 = vshrl.u32 %v159, 7
    %v161 = vsub.s32 0, %v160
    %v162 = vrot.slane %v133, %v161
    %v163 = vlaneseq
    %v164 = vshrl.u32 %v163, 7
    %v165 = vsub.s32 0, %v164
    %v166 = vrot.slane %v134, %v165
    %v167 = vlaneseq
    %v168 = vshrl.u32 %v167, 7
    %v169 = vsub.s32 0, %v168
    %v170 = vrot.slane %v135, %v169
    %v171 = vmul.f32 %v154, %v158
    %v172 = vmul.f32 %v153, %v162
    %v173 = vmul.f32 %v152, %v166
    %v174 = vmul.f32 %v151, %v170
    %175 = vrot.lane.b32.xlu0 %v128, 16
    %v176 = vpop.permute.xlu0 %175
    %177 = vrot.lane.b32.xlu0 %v129, 16
    %v178 = vpop.permute.xlu0 %177
    %179 = vrot.lane.b32.xlu0 %v130, 16
    %v180 = vpop.permute.xlu0 %179
    %181 = vrot.lane.b32.xlu0 %v131, 16
    %v182 = vpop.permute.xlu0 %181
    %vm183 = vcmp.lt.s32.totalorder %v149, 16
    %v184 = vsel %vm183, %v180, %v182
    %v185 = vsel %vm183, %v178, %v180
    %v186 = vsel %vm183, %v176, %v178
    %v187 = vsel %vm183, %v182, %v176
    %v188 = vlaneseq
    %v189 = vshrl.u32 %v188, 7
    %v190 = vsub.s32 1, %v189
    %v191 = vrot.slane %v132, %v190
    %v192 = vlaneseq
    %v193 = vshrl.u32 %v192, 7
    %v194 = vsub.s32 1, %v193
    %v195 = vrot.slane %v133, %v194
    %v196 = vlaneseq
    %v197 = vshrl.u32 %v196, 7
    %v198 = vsub.s32 1, %v197
    %v199 = vrot.slane %v134, %v198
    %v200 = vlaneseq
    %v201 = vshrl.u32 %v200, 7
    %v202 = vsub.s32 1, %v201
    %v203 = vrot.slane %v135, %v202
    %v204 = vmul.f32 %v187, %v191
    %v205 = vmul.f32 %v186, %v195
    %v206 = vmul.f32 %v185, %v199
    %v207 = vmul.f32 %v184, %v203
    %208 = vrot.lane.b32.xlu0 %v128, 15
    %v209 = vpop.permute.xlu0 %208
    %210 = vrot.lane.b32.xlu0 %v129, 15
    %v211 = vpop.permute.xlu0 %210
    %212 = vrot.lane.b32.xlu0 %v130, 15
    %v213 = vpop.permute.xlu0 %212
    %214 = vrot.lane.b32.xlu0 %v131, 15
    %v215 = vpop.permute.xlu0 %214
    %vm216 = vcmp.lt.s32.totalorder %v149, 15
    %v217 = vsel %vm216, %v213, %v215
    %v218 = vsel %vm216, %v211, %v213
    %v219 = vsel %vm216, %v209, %v211
    %v220 = vsel %vm216, %v215, %v209
    %v221 = vlaneseq
    %v222 = vshrl.u32 %v221, 7
    %v223 = vsub.s32 2, %v222
    %v224 = vrot.slane %v132, %v223
    %v225 = vlaneseq
    %v226 = vshrl.u32 %v225, 7
    %v227 = vsub.s32 2, %v226
    %v228 = vrot.slane %v133, %v227
    %v229 = vlaneseq
    %v230 = vshrl.u32 %v229, 7
    %v231 = vsub.s32 2, %v230
    %v232 = vrot.slane %v134, %v231
    %v233 = vlaneseq
    %v234 = vshrl.u32 %v233, 7
    %v235 = vsub.s32 2, %v234
    %v236 = vrot.slane %v135, %v235
    %v237 = vmul.f32 %v220, %v224
    %v238 = vmul.f32 %v219, %v228
    %v239 = vmul.f32 %v218, %v232
    %v240 = vmul.f32 %v217, %v236
    %241 = vrot.lane.b32.xlu0 %v128, 1
    %v242 = vpop.permute.xlu0 %241
    %243 = vrot.lane.b32.xlu0 %v129, 1
    %v244 = vpop.permute.xlu0 %243
    %245 = vrot.lane.b32.xlu0 %v130, 1
    %v246 = vpop.permute.xlu0 %245
    %247 = vrot.lane.b32.xlu0 %v131, 1
    %v248 = vpop.permute.xlu0 %247
    %vm249 = vcmp.lt.s32.totalorder %v149, 1
    %v250 = vsel %vm249, %v246, %v248
    %v251 = vsel %vm249, %v244, %v246
    %v252 = vsel %vm249, %v242, %v244
    %v253 = vsel %vm249, %v248, %v242
    %v254 = vlaneseq
    %v255 = vshrl.u32 %v254, 7
    %v256 = vsub.s32 3, %v255
    %v257 = vrot.slane %v132, %v256
    %v258 = vlaneseq
    %v259 = vshrl.u32 %v258, 7
    %v260 = vsub.s32 3, %v259
    %v261 = vrot.slane %v133, %v260
    %v262 = vlaneseq
    %v263 = vshrl.u32 %v262, 7
    %v264 = vsub.s32 3, %v263
    %v265 = vrot.slane %v134, %v264
    %v266 = vlaneseq
    %v267 = vshrl.u32 %v266, 7
    %v268 = vsub.s32 3, %v267
    %v269 = vrot.slane %v135, %v268
    %v270 = vmul.f32 %v253, %v257
    %v271 = vmul.f32 %v252, %v261
    %v272 = vmul.f32 %v251, %v265
    %v273 = vmul.f32 %v250, %v269
    %v274 = vlaneseq
    %v275 = vshrl.u32 %v274, 7
    %v276 = vsub.s32 4, %v275
    %v277 = vrot.slane %v132, %v276
    %v278 = vlaneseq
    %v279 = vshrl.u32 %v278, 7
    %v280 = vsub.s32 4, %v279
    %v281 = vrot.slane %v133, %v280
    %v282 = vlaneseq
    %v283 = vshrl.u32 %v282, 7
    %v284 = vsub.s32 4, %v283
    %v285 = vrot.slane %v134, %v284
    %v286 = vlaneseq
    %v287 = vshrl.u32 %v286, 7
    %v288 = vsub.s32 4, %v287
    %v289 = vrot.slane %v135, %v288
    %v290 = vmul.f32 %v128, %v277
    %v291 = vmul.f32 %v129, %v281
    %v292 = vmul.f32 %v130, %v285
    %v293 = vmul.f32 %v131, %v289
    %294 = vrot.lane.b32.xlu0 %v128, 127
    %v295 = vpop.permute.xlu0 %294
    %296 = vrot.lane.b32.xlu0 %v129, 127
    %v297 = vpop.permute.xlu0 %296
    %298 = vrot.lane.b32.xlu0 %v130, 127
    %v299 = vpop.permute.xlu0 %298
    %300 = vrot.lane.b32.xlu0 %v131, 127
    %v301 = vpop.permute.xlu0 %300
    %vm302 = vcmp.lt.s32.totalorder %v149, 127
    %v303 = vsel %vm302, %v299, %v301
    %v304 = vsel %vm302, %v297, %v299
    %v305 = vsel %vm302, %v295, %v297
    %v306 = vsel %vm302, %v301, %v295
    %v307 = vlaneseq
    %v308 = vshrl.u32 %v307, 7
    %v309 = vsub.s32 5, %v308
    %v310 = vrot.slane %v132, %v309
    %v311 = vlaneseq
    %v312 = vshrl.u32 %v311, 7
    %v313 = vsub.s32 5, %v312
    %v314 = vrot.slane %v133, %v313
    %v315 = vlaneseq
    %v316 = vshrl.u32 %v315, 7
    %v317 = vsub.s32 5, %v316
    %v318 = vrot.slane %v134, %v317
    %v319 = vlaneseq
    %v320 = vshrl.u32 %v319, 7
    %v321 = vsub.s32 5, %v320
    %v322 = vrot.slane %v135, %v321
    %v323 = vmul.f32 %v305, %v310
    %v324 = vmul.f32 %v304, %v314
    %v325 = vmul.f32 %v303, %v318
    %v326 = vmul.f32 %v306, %v322
    %327 = vrot.lane.b32.xlu0 %v128, 113
    %v328 = vpop.permute.xlu0 %327
    %329 = vrot.lane.b32.xlu0 %v129, 113
    %v330 = vpop.permute.xlu0 %329
    %331 = vrot.lane.b32.xlu0 %v130, 113
    %v332 = vpop.permute.xlu0 %331
    %333 = vrot.lane.b32.xlu0 %v131, 113
    %v334 = vpop.permute.xlu0 %333
    %vm335 = vcmp.lt.s32.totalorder %v149, 113
    %v336 = vsel %vm335, %v332, %v334
    %v337 = vsel %vm335, %v330, %v332
    %v338 = vsel %vm335, %v328, %v330
    %v339 = vsel %vm335, %v334, %v328
    %v340 = vlaneseq
    %v341 = vshrl.u32 %v340, 7
    %v342 = vsub.s32 6, %v341
    %v343 = vrot.slane %v132, %v342
    %v344 = vlaneseq
    %v345 = vshrl.u32 %v344, 7
    %v346 = vsub.s32 6, %v345
    %v347 = vrot.slane %v133, %v346
    %v348 = vlaneseq
    %v349 = vshrl.u32 %v348, 7
    %v350 = vsub.s32 6, %v349
    %v351 = vrot.slane %v134, %v350
    %v352 = vlaneseq
    %v353 = vshrl.u32 %v352, 7
    %v354 = vsub.s32 6, %v353
    %v355 = vrot.slane %v135, %v354
    %v356 = vmul.f32 %v338, %v343
    %v357 = vmul.f32 %v337, %v347
    %v358 = vmul.f32 %v336, %v351
    %v359 = vmul.f32 %v339, %v355
    %360 = vrot.lane.b32.xlu0 %v128, 112
    %v361 = vpop.permute.xlu0 %360
    %362 = vrot.lane.b32.xlu0 %v129, 112
    %v363 = vpop.permute.xlu0 %362
    %364 = vrot.lane.b32.xlu0 %v130, 112
    %v365 = vpop.permute.xlu0 %364
    %366 = vrot.lane.b32.xlu0 %v131, 112
    %v367 = vpop.permute.xlu0 %366
    %vm368 = vcmp.lt.s32.totalorder %v149, 112
    %v369 = vsel %vm368, %v365, %v367
    %v370 = vsel %vm368, %v363, %v365
    %v371 = vsel %vm368, %v361, %v363
    %v372 = vsel %vm368, %v367, %v361
    %v373 = vlaneseq
    %v374 = vshrl.u32 %v373, 7
    %v375 = vsub.s32 7, %v374
    %v376 = vrot.slane %v132, %v375
    %v377 = vlaneseq
    %v378 = vshrl.u32 %v377, 7
    %v379 = vsub.s32 7, %v378
    %v380 = vrot.slane %v133, %v379
    %v381 = vlaneseq
    %v382 = vshrl.u32 %v381, 7
    %v383 = vsub.s32 7, %v382
    %v384 = vrot.slane %v134, %v383
    %v385 = vlaneseq
    %v386 = vshrl.u32 %v385, 7
    %v387 = vsub.s32 7, %v386
    %v388 = vrot.slane %v135, %v387
    %v389 = vmul.f32 %v371, %v376
    %v390 = vmul.f32 %v370, %v380
    %v391 = vmul.f32 %v369, %v384
    %v392 = vmul.f32 %v372, %v388
    %393 = vrot.lane.b32.xlu0 %v128, 111
    %v394 = vpop.permute.xlu0 %393
    %395 = vrot.lane.b32.xlu0 %v129, 111
    %v396 = vpop.permute.xlu0 %395
    %397 = vrot.lane.b32.xlu0 %v130, 111
    %v398 = vpop.permute.xlu0 %397
    %399 = vrot.lane.b32.xlu0 %v131, 111
    %v400 = vpop.permute.xlu0 %399
    %vm401 = vcmp.lt.s32.totalorder %v149, 111
    %v402 = vsel %vm401, %v398, %v400
    %v403 = vsel %vm401, %v396, %v398
    %v404 = vsel %vm401, %v394, %v396
    %v405 = vsel %vm401, %v400, %v394
    %v406 = vlaneseq
    %v407 = vshrl.u32 %v406, 7
    %v408 = vsub.s32 0, %v407
    %v409 = vrot.slane %v136, %v408
    %v410 = vlaneseq
    %v411 = vshrl.u32 %v410, 7
    %v412 = vsub.s32 0, %v411
    %v413 = vrot.slane %v137, %v412
    %v414 = vlaneseq
    %v415 = vshrl.u32 %v414, 7
    %v416 = vsub.s32 0, %v415
    %v417 = vrot.slane %v138, %v416
    %v418 = vlaneseq
    %v419 = vshrl.u32 %v418, 7
    %v420 = vsub.s32 0, %v419
    %v421 = vrot.slane %v139, %v420
    %v422 = vmul.f32 %v404, %v409
    %v423 = vmul.f32 %v403, %v413
    %v424 = vmul.f32 %v402, %v417
    %v425 = vmul.f32 %v405, %v421
    %v426 = vld [vmem:[#allocation7] sm:$0xff]
    %vm427 = vcmask 588800
    %v429 = vsel %vm427, %v426, 0
    %431 = vmatprep.subr.mxu0 0.0
    %432 = vmatpush1.msra.mxu0 0.0
    %433 = vmatprep.subr.mxu0 0.0
    %434 = vmatpush1.msra.mxu0 0.0
    %435 = vmatprep.subr.mxu0 0.0
    %436 = vmatpush1.msra.mxu0 0.0
    %437 = vmatprep.subr.mxu0 0.0
    %438 = vmatpush1.msra.mxu0 0.0
    %439 = vmatprep.subr.mxu0 0.0
    %440 = vmatpush1.msra.mxu0 0.0
    %441 = vmatprep.subr.mxu0 0.0
    %442 = vmatpush1.msra.mxu0 0.0
    %443 = vmatprep.subr.mxu0 0.0
    %444 = vmatpush1.msra.mxu0 0.0
    %445 = vmatprep.subr.mxu0 %v423
    %446 = vmatpush1.msra.mxu0 %v422
    %447 = vmatprep.subr.mxu0 %v390
    %448 = vmatpush1.msra.mxu0 %v389
    %449 = vmatprep.subr.mxu0 %v357
    %450 = vmatpush1.msra.mxu0 %v356
    %451 = vmatprep.subr.mxu0 %v324
    %452 = vmatpush1.msra.mxu0 %v323
    %453 = vmatprep.subr.mxu0 %v291
    %454 = vmatpush1.msra.mxu0 %v290
    %455 = vmatprep.subr.mxu0 %v271
    %456 = vmatpush1.msra.mxu0 %v270
    %457 = vmatprep.subr.mxu0 %v238
    %458 = vmatpush1.msra.mxu0 %v237
    %459 = vmatprep.subr.mxu0 %v205
    %460 = vmatpush1.msra.mxu0 %v204
    %461 = vmatprep.subr.mxu0 %v172
    %462 = vmatpush1.msra.mxu0 %v171
    %463 = vmatprep.subr.mxu0 0.0
    %464 = vmatpush2.msra.mxu0 0.0
    %465 = vmatprep.subr.mxu0 0.0
    %466 = vmatpush2.msra.mxu0 0.0
    %467 = vmatprep.subr.mxu0 0.0
    %468 = vmatpush2.msra.mxu0 0.0
    %469 = vmatprep.subr.mxu0 0.0
    %470 = vmatpush2.msra.mxu0 0.0
    %471 = vmatprep.subr.mxu0 0.0
    %472 = vmatpush2.msra.mxu0 0.0
    %473 = vmatprep.subr.mxu0 0.0
    %474 = vmatpush2.msra.mxu0 0.0
    %475 = vmatprep.subr.mxu0 0.0
    %476 = vmatpush2.msra.mxu0 0.0
    %477 = vmatprep.subr.mxu0 0.0
    %478 = vmatpush2.msra.mxu0 0.0
    %479 = vmatprep.subr.mxu0 0.0
    %480 = vmatpush2.msra.mxu0 0.0
    %481 = vmatprep.subr.mxu0 0.0
    %482 = vmatpush2.msra.mxu0 0.0
    %483 = vmatprep.subr.mxu0 0.0
    %484 = vmatpush2.msra.mxu0 0.0
    %485 = vmatprep.subr.mxu0 0.0
    %486 = vmatpush2.msra.mxu0 0.0
    %487 = vmatprep.subr.mxu0 0.0
    %488 = vmatpush2.msra.mxu0 0.0
    %489 = vmatprep.subr.mxu0 0.0
    %490 = vmatpush2.msra.mxu0 0.0
    %491 = vmatprep.subr.mxu0 0.0
    %492 = vmatpush2.msra.mxu0 0.0
    %493 = vmatprep.subr.mxu0 0.0
    %494 = vmatpush2.msra.mxu0 0.0
    %495 = vmatprep.mubr.f32.mxu0 0.0
    %496 = vmatmul.mubr.f32.gmra.mxu0 %v429
    %v497 = vpop.f32.mrf.mxu0
    %v498 = vadd.f32 0.0, %v497
    %v499 = vpop.f32.mrf.mxu0
    %v500 = vadd.f32 0.0, %v499
    %501 = vdwg.mxu0
    %502 = vmatprep.subr.mxu0 0.0
    %503 = vmatpush1.msra.mxu0 0.0
    %504 = vmatprep.subr.mxu0 0.0
    %505 = vmatpush1.msra.mxu0 0.0
    %506 = vmatprep.subr.mxu0 0.0
    %507 = vmatpush1.msra.mxu0 0.0
    %508 = vmatprep.subr.mxu0 0.0
    %509 = vmatpush1.msra.mxu0 0.0
    %510 = vmatprep.subr.mxu0 0.0
    %511 = vmatpush1.msra.mxu0 0.0
    %512 = vmatprep.subr.mxu0 0.0
    %513 = vmatpush1.msra.mxu0 0.0
    %514 = vmatprep.subr.mxu0 0.0
    %515 = vmatpush1.msra.mxu0 0.0
    %516 = vmatprep.subr.mxu0 %v425
    %517 = vmatpush1.msra.mxu0 %v424
    %518 = vmatprep.subr.mxu0 %v392
    %519 = vmatpush1.msra.mxu0 %v391
    %520 = vmatprep.subr.mxu0 %v359
    %521 = vmatpush1.msra.mxu0 %v358
    %522 = vmatprep.subr.mxu0 %v326
    %523 = vmatpush1.msra.mxu0 %v325
    %524 = vmatprep.subr.mxu0 %v293
    %525 = vmatpush1.msra.mxu0 %v292
    %526 = vmatprep.subr.mxu0 %v273
    %527 = vmatpush1.msra.mxu0 %v272
    %528 = vmatprep.subr.mxu0 %v240
    %529 = vmatpush1.msra.mxu0 %v239
    %530 = vmatprep.subr.mxu0 %v207
    %531 = vmatpush1.msra.mxu0 %v206
    %532 = vmatprep.subr.mxu0 %v174
    %533 = vmatpush1.msra.mxu0 %v173
    %534 = vmatprep.subr.mxu0 0.0
    %535 = vmatpush2.msra.mxu0 0.0
    %536 = vmatprep.subr.mxu0 0.0
    %537 = vmatpush2.msra.mxu0 0.0
    %538 = vmatprep.subr.mxu0 0.0
    %539 = vmatpush2.msra.mxu0 0.0
    %540 = vmatprep.subr.mxu0 0.0
    %541 = vmatpush2.msra.mxu0 0.0
    %542 = vmatprep.subr.mxu0 0.0
    %543 = vmatpush2.msra.mxu0 0.0
    %544 = vmatprep.subr.mxu0 0.0
    %545 = vmatpush2.msra.mxu0 0.0
    %546 = vmatprep.subr.mxu0 0.0
    %547 = vmatpush2.msra.mxu0 0.0
    %548 = vmatprep.subr.mxu0 0.0
    %549 = vmatpush2.msra.mxu0 0.0
    %550 = vmatprep.subr.mxu0 0.0
    %551 = vmatpush2.msra.mxu0 0.0
    %552 = vmatprep.subr.mxu0 0.0
    %553 = vmatpush2.msra.mxu0 0.0
    %554 = vmatprep.subr.mxu0 0.0
    %555 = vmatpush2.msra.mxu0 0.0
    %556 = vmatprep.subr.mxu0 0.0
    %557 = vmatpush2.msra.mxu0 0.0
    %558 = vmatprep.subr.mxu0 0.0
    %559 = vmatpush2.msra.mxu0 0.0
    %560 = vmatprep.subr.mxu0 0.0
    %561 = vmatpush2.msra.mxu0 0.0
    %562 = vmatprep.subr.mxu0 0.0
    %563 = vmatpush2.msra.mxu0 0.0
    %564 = vmatprep.subr.mxu0 0.0
    %565 = vmatpush2.msra.mxu0 0.0
    %566 = vmatprep.mubr.f32.mxu0 0.0
    %567 = vmatmul.mubr.f32.gmra.mxu0 %v429
    %v568 = vpop.f32.mrf.mxu0
    %v569 = vadd.f32 0.0, %v568
    %v570 = vpop.f32.mrf.mxu0
    %v571 = vadd.f32 0.0, %v570
    %572 = vdwg.mxu0
    %v573 = vld [vmem:[#allocation8] sm:$0xff]
    %v574 = vld [vmem:[#allocation8 + $0x8] sm:$0xff]
    %v575 = vld [vmem:[#allocation10] sm:$0xff]
    %v576 = vld [vmem:[#allocation10 + $0x8] sm:$0xff]
    %v577 = vadd.f32 %v498, %v500
    %578 = vadd.xlane.f32.xlu0 %v577
    %v579 = vpop.xlane.xlu0 %578
    %v580 = vrot.slane %v579, 4
    %v581 = vadd.f32 %v579, %v580
    %v582 = vrot.slane %v581, 2
    %v583 = vadd.f32 %v581, %v582
    %v584 = vrot.slane %v583, 1
    %v585 = vadd.f32 %v583, %v584
    %s586 = vtos %v585
    %v587 = vstv %s586
    %v588 = vmul.f32 %v587, 0.00048828125
    %v589 = vmul.f32 %v498, %v498
    %v590 = vmul.f32 %v500, %v500
    %v591 = vadd.f32 %v589, %v590
    %592 = vadd.xlane.f32.xlu0 %v591
    %v593 = vpop.xlane.xlu0 %592
    %v594 = vrot.slane %v593, 4
    %v595 = vadd.f32 %v593, %v594
    %v596 = vrot.slane %v595, 2
    %v597 = vadd.f32 %v595, %v596
    %v598 = vrot.slane %v597, 1
    %v599 = vadd.f32 %v597, %v598
    %s600 = vtos %v599
    %v601 = vstv %s600
    %v602 = vmul.f32 %v601, 0.00048828125
    %v603 = vmul.f32 %v588, %v588
    %v604 = vsub.f32 %v602, %v603
    %v605 = vsub.f32 %v498, %v588
    %v606 = vsub.f32 %v500, %v588
    %v607 = vadd.f32 %v604, 1e-05
    %v608 = vrsqrt.pop %v607
    %v609 = vmul.f32 %v605, %v608
    %v610 = vmul.f32 %v606, %v608
    %v611 = vmul.f32 %v609, %v573
    %v612 = vmul.f32 %v610, %v574
    %v613 = vadd.f32 %v611, %v575
    %v614 = vadd.f32 %v612, %v576
    %v615 = vadd.f32 %v569, %v571
    %616 = vadd.xlane.f32.xlu0 %v615
    %v617 = vpop.xlane.xlu0 %616
    %v618 = vrot.slane %v617, 4
    %v619 = vadd.f32 %v617, %v618
    %v620 = vrot.slane %v619, 2
    %v621 = vadd.f32 %v619, %v620
    %v622 = vrot.slane %v621, 1
    %v623 = vadd.f32 %v621, %v622
    %s624 = vtos %v623
    %v625 = vstv %s624
    %v626 = vmul.f32 %v625, 0.00048828125
    %v627 = vmul.f32 %v569, %v569
    %v628 = vmul.f32 %v571, %v571
    %v629 = vadd.f32 %v627, %v628
    %630 = vadd.xlane.f32.xlu0 %v629
    %v631 = vpop.xlane.xlu0 %630
    %v632 = vrot.slane %v631, 4
    %v633 = vadd.f32 %v631, %v632
    %v634 = vrot.slane %v633, 2
    %v635 = vadd.f32 %v633, %v634
    %v636 = vrot.slane %v635, 1
    %v637 = vadd.f32 %v635, %v636
    %s638 = vtos %v637
    %v639 = vstv %s638
    %v640 = vmul.f32 %v639, 0.00048828125
    %v641 = vmul.f32 %v626, %v626
    %v642 = vsub.f32 %v640, %v641
    %v643 = vsub.f32 %v569, %v626
    %v644 = vsub.f32 %v571, %v626
    %v645 = vadd.f32 %v642, 1e-05
    %v646 = vrsqrt.pop %v645
    %v647 = vmul.f32 %v643, %v646
    %v648 = vmul.f32 %v644, %v646
    %v649 = vmul.f32 %v647, %v573
    %v650 = vmul.f32 %v648, %v574
    %v651 = vadd.f32 %v649, %v575
    %v652 = vadd.f32 %v650, %v576
    %v653 = vmax.f32 %v613, 0.0
    %v654 = vmax.f32 %v614, 0.0
    %v655 = vmax.f32 %v651, 0.0
    %v656 = vmax.f32 %v652, 0.0
    %657 = vrot.lane.b32.xlu0 %v653, 17
    %v658 = vpop.permute.xlu0 %657
    %659 = vrot.lane.b32.xlu0 %v654, 17
    %v660 = vpop.permute.xlu0 %659
    %661 = vrot.lane.b32.xlu0 %v655, 17
    %v662 = vpop.permute.xlu0 %661
    %663 = vrot.lane.b32.xlu0 %v656, 17
    %v664 = vpop.permute.xlu0 %663
    %v665 = vsel %vm150, %v662, %v664
    %v666 = vsel %vm150, %v660, %v662
    %v667 = vsel %vm150, %v658, %v660
    %v668 = vsel %vm150, %v664, %v658
    %v669 = vmul.f32 %v668, %v158
    %v670 = vmul.f32 %v667, %v162
    %v671 = vmul.f32 %v666, %v166
    %v672 = vmul.f32 %v665, %v170
    %673 = vrot.lane.b32.xlu0 %v653, 16
    %v674 = vpop.permute.xlu0 %673
    %675 = vrot.lane.b32.xlu0 %v654, 16
    %v676 = vpop.permute.xlu0 %675
    %677 = vrot.lane.b32.xlu0 %v655, 16
    %v678 = vpop.permute.xlu0 %677
    %679 = vrot.lane.b32.xlu0 %v656, 16
    %v680 = vpop.permute.xlu0 %679
    %v681 = vsel %vm183, %v678, %v680
    %v682 = vsel %vm183, %v676, %v678
    %v683 = vsel %vm183, %v674, %v676
    %v684 = vsel %vm183, %v680, %v674
    %v685 = vmul.f32 %v684, %v191
    %v686 = vmul.f32 %v683, %v195
    %v687 = vmul.f32 %v682, %v199
    %v688 = vmul.f32 %v681, %v203
    %689 = vrot.lane.b32.xlu0 %v653, 15
    %v690 = vpop.permute.xlu0 %689
    %691 = vrot.lane.b32.xlu0 %v654, 15
    %v692 = vpop.permute.xlu0 %691
    %693 = vrot.lane.b32.xlu0 %v655, 15
    %v694 = vpop.permute.xlu0 %693
    %695 = vrot.lane.b32.xlu0 %v656, 15
    %v696 = vpop.permute.xlu0 %695
    %v697 = vsel %vm216, %v694, %v696
    %v698 = vsel %vm216, %v692, %v694
    %v699 = vsel %vm216, %v690, %v692
    %v700 = vsel %vm216, %v696, %v690
    %v701 = vmul.f32 %v700, %v224
    %v702 = vmul.f32 %v699, %v228
    %v703 = vmul.f32 %v698, %v232
    %v704 = vmul.f32 %v697, %v236
    %705 = vrot.lane.b32.xlu0 %v653, 1
    %v706 = vpop.permute.xlu0 %705
    %707 = vrot.lane.b32.xlu0 %v654, 1
    %v708 = vpop.permute.xlu0 %707
    %709 = vrot.lane.b32.xlu0 %v655, 1
    %v710 = vpop.permute.xlu0 %709
    %711 = vrot.lane.b32.xlu0 %v656, 1
    %v712 = vpop.permute.xlu0 %711
    %v713 = vsel %vm249, %v710, %v712
    %v714 = vsel %vm249, %v708, %v710
    %v715 = vsel %vm249, %v706, %v708
    %v716 = vsel %vm249, %v712, %v706
    %v717 = vmul.f32 %v716, %v257
    %v718 = vmul.f32 %v715, %v261
    %v719 = vmul.f32 %v714, %v265
    %v720 = vmul.f32 %v713, %v269
    %v721 = vmul.f32 %v653, %v277
    %v722 = vmul.f32 %v654, %v281
    %v723 = vmul.f32 %v655, %v285
    %v724 = vmul.f32 %v656, %v289
    %725 = vrot.lane.b32.xlu0 %v653, 127
    %v726 = vpop.permute.xlu0 %725
    %727 = vrot.lane.b32.xlu0 %v654, 127
    %v728 = vpop.permute.xlu0 %727
    %729 = vrot.lane.b32.xlu0 %v655, 127
    %v730 = vpop.permute.xlu0 %729
    %731 = vrot.lane.b32.xlu0 %v656, 127
    %v732 = vpop.permute.xlu0 %731
    %v733 = vsel %vm302, %v730, %v732
    %v734 = vsel %vm302, %v728, %v730
    %v735 = vsel %vm302, %v726, %v728
    %v736 = vsel %vm302, %v732, %v726
    %v737 = vmul.f32 %v735, %v310
    %v738 = vmul.f32 %v734, %v314
    %v739 = vmul.f32 %v733, %v318
    %v740 = vmul.f32 %v736, %v322
    %741 = vrot.lane.b32.xlu0 %v653, 113
    %v742 = vpop.permute.xlu0 %741
    %743 = vrot.lane.b32.xlu0 %v654, 113
    %v744 = vpop.permute.xlu0 %743
    %745 = vrot.lane.b32.xlu0 %v655, 113
    %v746 = vpop.permute.xlu0 %745
    %747 = vrot.lane.b32.xlu0 %v656, 113
    %v748 = vpop.permute.xlu0 %747
    %v749 = vsel %vm335, %v746, %v748
    %v750 = vsel %vm335, %v744, %v746
    %v751 = vsel %vm335, %v742, %v744
    %v752 = vsel %vm335, %v748, %v742
    %v753 = vmul.f32 %v751, %v343
    %v754 = vmul.f32 %v750, %v347
    %v755 = vmul.f32 %v749, %v351
    %v756 = vmul.f32 %v752, %v355
    %757 = vrot.lane.b32.xlu0 %v653, 112
    %v758 = vpop.permute.xlu0 %757
    %759 = vrot.lane.b32.xlu0 %v654, 112
    %v760 = vpop.permute.xlu0 %759
    %761 = vrot.lane.b32.xlu0 %v655, 112
    %v762 = vpop.permute.xlu0 %761
    %763 = vrot.lane.b32.xlu0 %v656, 112
    %v764 = vpop.permute.xlu0 %763
    %v765 = vsel %vm368, %v762, %v764
    %v766 = vsel %vm368, %v760, %v762
    %v767 = vsel %vm368, %v758, %v760
    %v768 = vsel %vm368, %v764, %v758
    %v769 = vmul.f32 %v767, %v376
    %v770 = vmul.f32 %v766, %v380
    %v771 = vmul.f32 %v765, %v384
    %v772 = vmul.f32 %v768, %v388
    %773 = vrot.lane.b32.xlu0 %v653, 111
    %v774 = vpop.permute.xlu0 %773
    %775 = vrot.lane.b32.xlu0 %v654, 111
    %v776 = vpop.permute.xlu0 %775
    %777 = vrot.lane.b32.xlu0 %v655, 111
    %v778 = vpop.permute.xlu0 %777
    %779 = vrot.lane.b32.xlu0 %v656, 111
    %v780 = vpop.permute.xlu0 %779
    %v781 = vsel %vm401, %v778, %v780
    %v782 = vsel %vm401, %v776, %v778
    %v783 = vsel %vm401, %v774, %v776
    %v784 = vsel %vm401, %v780, %v774
    %v785 = vmul.f32 %v783, %v409
    %v786 = vmul.f32 %v782, %v413
    %v787 = vmul.f32 %v781, %v417
    %v788 = vmul.f32 %v784, %v421
    %v789 = vld [vmem:[%s5] sm:$0xff]
    %v791 = vsel %vm427, %v789, 0
    %793 = vmatprep.subr.mxu0 0.0
    %794 = vmatpush1.msra.mxu0 0.0
    %795 = vmatprep.subr.mxu0 0.0
    %796 = vmatpush1.msra.mxu0 0.0
    %797 = vmatprep.subr.mxu0 0.0
    %798 = vmatpush1.msra.mxu0 0.0
    %799 = vmatprep.subr.mxu0 0.0
    %800 = vmatpush1.msra.mxu0 0.0
    %801 = vmatprep.subr.mxu0 0.0
    %802 = vmatpush1.msra.mxu0 0.0
    %803 = vmatprep.subr.mxu0 0.0
    %804 = vmatpush1.msra.mxu0 0.0
    %805 = vmatprep.subr.mxu0 0.0
    %806 = vmatpush1.msra.mxu0 0.0
    %807 = vmatprep.subr.mxu0 %v786
    %808 = vmatpush1.msra.mxu0 %v785
    %809 = vmatprep.subr.mxu0 %v770
    %810 = vmatpush1.msra.mxu0 %v769
    %811 = vmatprep.subr.mxu0 %v754
    %812 = vmatpush1.msra.mxu0 %v753
    %813 = vmatprep.subr.mxu0 %v738
    %814 = vmatpush1.msra.mxu0 %v737
    %815 = vmatprep.subr.mxu0 %v722
    %816 = vmatpush1.msra.mxu0 %v721
    %817 = vmatprep.subr.mxu0 %v718
    %818 = vmatpush1.msra.mxu0 %v717
    %819 = vmatprep.subr.mxu0 %v702
    %820 = vmatpush1.msra.mxu0 %v701
    %821 = vmatprep.subr.mxu0 %v686
    %822 = vmatpush1.msra.mxu0 %v685
    %823 = vmatprep.subr.mxu0 %v670
    %824 = vmatpush1.msra.mxu0 %v669
    %825 = vmatprep.subr.mxu0 0.0
    %826 = vmatpush2.msra.mxu0 0.0
    %827 = vmatprep.subr.mxu0 0.0
    %828 = vmatpush2.msra.mxu0 0.0
    %829 = vmatprep.subr.mxu0 0.0
    %830 = vmatpush2.msra.mxu0 0.0
    %831 = vmatprep.subr.mxu0 0.0
    %832 = vmatpush2.msra.mxu0 0.0
    %833 = vmatprep.subr.mxu0 0.0
    %834 = vmatpush2.msra.mxu0 0.0
    %835 = vmatprep.subr.mxu0 0.0
    %836 = vmatpush2.msra.mxu0 0.0
    %837 = vmatprep.subr.mxu0 0.0
    %838 = vmatpush2.msra.mxu0 0.0
    %839 = vmatprep.subr.mxu0 0.0
    %840 = vmatpush2.msra.mxu0 0.0
    %841 = vmatprep.subr.mxu0 0.0
    %842 = vmatpush2.msra.mxu0 0.0
    %843 = vmatprep.subr.mxu0 0.0
    %844 = vmatpush2.msra.mxu0 0.0
    %845 = vmatprep.subr.mxu0 0.0
    %846 = vmatpush2.msra.mxu0 0.0
    %847 = vmatprep.subr.mxu0 0.0
    %848 = vmatpush2.msra.mxu0 0.0
    %849 = vmatprep.subr.mxu0 0.0
    %850 = vmatpush2.msra.mxu0 0.0
    %851 = vmatprep.subr.mxu0 0.0
    %852 = vmatpush2.msra.mxu0 0.0
    %853 = vmatprep.subr.mxu0 0.0
    %854 = vmatpush2.msra.mxu0 0.0
    %855 = vmatprep.subr.mxu0 0.0
    %856 = vmatpush2.msra.mxu0 0.0
    %857 = vmatprep.mubr.f32.mxu0 0.0
    %858 = vmatmul.mubr.f32.gmra.mxu0 %v791
    %v859 = vpop.f32.mrf.mxu0
    %v860 = vadd.f32 0.0, %v859
    %v861 = vpop.f32.mrf.mxu0
    %v862 = vadd.f32 0.0, %v861
    %863 = vdwg.mxu0
    %864 = vmatprep.subr.mxu0 0.0
    %865 = vmatpush1.msra.mxu0 0.0
    %866 = vmatprep.subr.mxu0 0.0
    %867 = vmatpush1.msra.mxu0 0.0
    %868 = vmatprep.subr.mxu0 0.0
    %869 = vmatpush1.msra.mxu0 0.0
    %870 = vmatprep.subr.mxu0 0.0
    %871 = vmatpush1.msra.mxu0 0.0
    %872 = vmatprep.subr.mxu0 0.0
    %873 = vmatpush1.msra.mxu0 0.0
    %874 = vmatprep.subr.mxu0 0.0
    %875 = vmatpush1.msra.mxu0 0.0
    %876 = vmatprep.subr.mxu0 0.0
    %877 = vmatpush1.msra.mxu0 0.0
    %878 = vmatprep.subr.mxu0 %v788
    %879 = vmatpush1.msra.mxu0 %v787
    %880 = vmatprep.subr.mxu0 %v772
    %881 = vmatpush1.msra.mxu0 %v771
    %882 = vmatprep.subr.mxu0 %v756
    %883 = vmatpush1.msra.mxu0 %v755
    %884 = vmatprep.subr.mxu0 %v740
    %885 = vmatpush1.msra.mxu0 %v739
    %886 = vmatprep.subr.mxu0 %v724
    %887 = vmatpush1.msra.mxu0 %v723
    %888 = vmatprep.subr.mxu0 %v720
    %889 = vmatpush1.msra.mxu0 %v719
    %890 = vmatprep.subr.mxu0 %v704
    %891 = vmatpush1.msra.mxu0 %v703
    %892 = vmatprep.subr.mxu0 %v688
    %893 = vmatpush1.msra.mxu0 %v687
    %894 = vmatprep.subr.mxu0 %v672
    %895 = vmatpush1.msra.mxu0 %v671
    %896 = vmatprep.subr.mxu0 0.0
    %897 = vmatpush2.msra.mxu0 0.0
    %898 = vmatprep.subr.mxu0 0.0
    %899 = vmatpush2.msra.mxu0 0.0
    %900 = vmatprep.subr.mxu0 0.0
    %901 = vmatpush2.msra.mxu0 0.0
    %902 = vmatprep.subr.mxu0 0.0
    %903 = vmatpush2.msra.mxu0 0.0
    %904 = vmatprep.subr.mxu0 0.0
    %905 = vmatpush2.msra.mxu0 0.0
    %906 = vmatprep.subr.mxu0 0.0
    %907 = vmatpush2.msra.mxu0 0.0
    %908 = vmatprep.subr.mxu0 0.0
    %909 = vmatpush2.msra.mxu0 0.0
    %910 = vmatprep.subr.mxu0 0.0
    %911 = vmatpush2.msra.mxu0 0.0
    %912 = vmatprep.subr.mxu0 0.0
    %913 = vmatpush2.msra.mxu0 0.0
    %914 = vmatprep.subr.mxu0 0.0
    %915 = vmatpush2.msra.mxu0 0.0
    %916 = vmatprep.subr.mxu0 0.0
    %917 = vmatpush2.msra.mxu0 0.0
    %918 = vmatprep.subr.mxu0 0.0
    %919 = vmatpush2.msra.mxu0 0.0
    %920 = vmatprep.subr.mxu0 0.0
    %921 = vmatpush2.msra.mxu0 0.0
    %922 = vmatprep.subr.mxu0 0.0
    %923 = vmatpush2.msra.mxu0 0.0
    %924 = vmatprep.subr.mxu0 0.0
    %925 = vmatpush2.msra.mxu0 0.0
    %926 = vmatprep.subr.mxu0 0.0
    %927 = vmatpush2.msra.mxu0 0.0
    %928 = vmatprep.mubr.f32.mxu0 0.0
    %929 = vmatmul.mubr.f32.gmra.mxu0 %v791
    %v930 = vpop.f32.mrf.mxu0
    %v931 = vadd.f32 0.0, %v930
    %v932 = vpop.f32.mrf.mxu0
    %v933 = vadd.f32 0.0, %v932
    %934 = vdwg.mxu0
    %v935 = vld [vmem:[#allocation11] sm:$0xff]
    %v936 = vld [vmem:[#allocation11 + $0x8] sm:$0xff]
    %v937 = vld [vmem:[#allocation13] sm:$0xff]
    %v938 = vld [vmem:[#allocation13 + $0x8] sm:$0xff]
    %v939 = vadd.f32 %v860, %v862
    %940 = vadd.xlane.f32.xlu0 %v939
    %v941 = vpop.xlane.xlu0 %940
    %v942 = vrot.slane %v941, 4
    %v943 = vadd.f32 %v941, %v942
    %v944 = vrot.slane %v943, 2
    %v945 = vadd.f32 %v943, %v944
    %v946 = vrot.slane %v945, 1
    %v947 = vadd.f32 %v945, %v946
    %s948 = vtos %v947
    %v949 = vstv %s948
    %v950 = vmul.f32 %v949, 0.00048828125
    %v951 = vmul.f32 %v860, %v860
    %v952 = vmul.f32 %v862, %v862
    %v953 = vadd.f32 %v951, %v952
    %954 = vadd.xlane.f32.xlu0 %v953
    %v955 = vpop.xlane.xlu0 %954
    %v956 = vrot.slane %v955, 4
    %v957 = vadd.f32 %v955, %v956
    %v958 = vrot.slane %v957, 2
    %v959 = vadd.f32 %v957, %v958
    %v960 = vrot.slane %v959, 1
    %v961 = vadd.f32 %v959, %v960
    %s962 = vtos %v961
    %v963 = vstv %s962
    %v964 = vmul.f32 %v963, 0.00048828125
    %v965 = vmul.f32 %v950, %v950
    %v966 = vsub.f32 %v964, %v965
    %v967 = vsub.f32 %v860, %v950
    %v968 = vsub.f32 %v862, %v950
    %v969 = vadd.f32 %v966, 1e-05
    %v970 = vrsqrt.pop %v969
    %v971 = vmul.f32 %v967, %v970
    %v972 = vmul.f32 %v968, %v970
    %v973 = vmul.f32 %v971, %v935
    %v974 = vmul.f32 %v972, %v936
    %v975 = vadd.f32 %v973, %v937
    %v976 = vadd.f32 %v974, %v938
    %v977 = vadd.f32 %v931, %v933
    %978 = vadd.xlane.f32.xlu0 %v977
    %v979 = vpop.xlane.xlu0 %978
    %v980 = vrot.slane %v979, 4
    %v981 = vadd.f32 %v979, %v980
    %v982 = vrot.slane %v981, 2
    %v983 = vadd.f32 %v981, %v982
    %v984 = vrot.slane %v983, 1
    %v985 = vadd.f32 %v983, %v984
    %s986 = vtos %v985
    %v987 = vstv %s986
    %v988 = vmul.f32 %v987, 0.00048828125
    %v989 = vmul.f32 %v931, %v931
    %v990 = vmul.f32 %v933, %v933
    %v991 = vadd.f32 %v989, %v990
    %992 = vadd.xlane.f32.xlu0 %v991
    %v993 = vpop.xlane.xlu0 %992
    %v994 = vrot.slane %v993, 4
    %v995 = vadd.f32 %v993, %v994
    %v996 = vrot.slane %v995, 2
    %v997 = vadd.f32 %v995, %v996
    %v998 = vrot.slane %v997, 1
    %v999 = vadd.f32 %v997, %v998
    %s1000 = vtos %v999
    %v1001 = vstv %s1000
    %v1002 = vmul.f32 %v1001, 0.00048828125
    %v1003 = vmul.f32 %v988, %v988
    %v1004 = vsub.f32 %v1002, %v1003
    %v1005 = vsub.f32 %v931, %v988
    %v1006 = vsub.f32 %v933, %v988
    %v1007 = vadd.f32 %v1004, 1e-05
    %v1008 = vrsqrt.pop %v1007
    %v1009 = vmul.f32 %v1005, %v1008
    %v1010 = vmul.f32 %v1006, %v1008
    %v1011 = vmul.f32 %v1009, %v935
    %v1012 = vmul.f32 %v1010, %v936
    %v1013 = vadd.f32 %v1011, %v937
    %v1014 = vadd.f32 %v1012, %v938
    %v1015 = vld [vmem:[#allocation14] sm:$0xff]
    %vm1016 = vcmask 64512
    %v1018 = vsel %vm1016, %v1015, 0
    %1020 = vmatprep.subr.mxu0 0.0
    %1021 = vmatpush1.msra.mxu0 0.0
    %1022 = vmatprep.subr.mxu0 0.0
    %1023 = vmatpush1.msra.mxu0 0.0
    %1024 = vmatprep.subr.mxu0 0.0
    %1025 = vmatpush1.msra.mxu0 0.0
    %1026 = vmatprep.subr.mxu0 0.0
    %1027 = vmatpush1.msra.mxu0 0.0
    %1028 = vmatprep.subr.mxu0 0.0
    %1029 = vmatpush1.msra.mxu0 0.0
    %1030 = vmatprep.subr.mxu0 0.0
    %1031 = vmatpush1.msra.mxu0 0.0
    %1032 = vmatprep.subr.mxu0 0.0
    %1033 = vmatpush1.msra.mxu0 0.0
    %1034 = vmatprep.subr.mxu0 0.0
    %1035 = vmatpush1.msra.mxu0 0.0
    %1036 = vmatprep.subr.mxu0 0.0
    %1037 = vmatpush1.msra.mxu0 0.0
    %1038 = vmatprep.subr.mxu0 0.0
    %1039 = vmatpush1.msra.mxu0 0.0
    %1040 = vmatprep.subr.mxu0 0.0
    %1041 = vmatpush1.msra.mxu0 0.0
    %1042 = vmatprep.subr.mxu0 0.0
    %1043 = vmatpush1.msra.mxu0 0.0
    %1044 = vmatprep.subr.mxu0 0.0
    %1045 = vmatpush1.msra.mxu0 0.0
    %1046 = vmatprep.subr.mxu0 0.0
    %1047 = vmatpush1.msra.mxu0 0.0
    %1048 = vmatprep.subr.mxu0 0.0
    %1049 = vmatpush1.msra.mxu0 0.0
    %1050 = vmatprep.subr.mxu0 %v129
    %1051 = vmatpush1.msra.mxu0 %v128
    %1052 = vmatprep.subr.mxu0 0.0
    %1053 = vmatpush2.msra.mxu0 0.0
    %1054 = vmatprep.subr.mxu0 0.0
    %1055 = vmatpush2.msra.mxu0 0.0
    %1056 = vmatprep.subr.mxu0 0.0
    %1057 = vmatpush2.msra.mxu0 0.0
    %1058 = vmatprep.subr.mxu0 0.0
    %1059 = vmatpush2.msra.mxu0 0.0
    %1060 = vmatprep.subr.mxu0 0.0
    %1061 = vmatpush2.msra.mxu0 0.0
    %1062 = vmatprep.subr.mxu0 0.0
    %1063 = vmatpush2.msra.mxu0 0.0
    %1064 = vmatprep.subr.mxu0 0.0
    %1065 = vmatpush2.msra.mxu0 0.0
    %1066 = vmatprep.subr.mxu0 0.0
    %1067 = vmatpush2.msra.mxu0 0.0
    %1068 = vmatprep.subr.mxu0 0.0
    %1069 = vmatpush2.msra.mxu0 0.0
    %1070 = vmatprep.subr.mxu0 0.0
    %1071 = vmatpush2.msra.mxu0 0.0
    %1072 = vmatprep.subr.mxu0 0.0
    %1073 = vmatpush2.msra.mxu0 0.0
    %1074 = vmatprep.subr.mxu0 0.0
    %1075 = vmatpush2.msra.mxu0 0.0
    %1076 = vmatprep.subr.mxu0 0.0
    %1077 = vmatpush2.msra.mxu0 0.0
    %1078 = vmatprep.subr.mxu0 0.0
    %1079 = vmatpush2.msra.mxu0 0.0
    %1080 = vmatprep.subr.mxu0 0.0
    %1081 = vmatpush2.msra.mxu0 0.0
    %1082 = vmatprep.subr.mxu0 0.0
    %1083 = vmatpush2.msra.mxu0 0.0
    %1084 = vmatprep.mubr.f32.mxu0 0.0
    %1085 = vmatmul.mubr.f32.gmra.mxu0 %v1018
    %v1086 = vpop.f32.mrf.mxu0
    %v1087 = vadd.f32 0.0, %v1086
    %v1088 = vpop.f32.mrf.mxu0
    %v1089 = vadd.f32 0.0, %v1088
    %1090 = vdwg.mxu0
    %1091 = vmatprep.subr.mxu0 0.0
    %1092 = vmatpush1.msra.mxu0 0.0
    %1093 = vmatprep.subr.mxu0 0.0
    %1094 = vmatpush1.msra.mxu0 0.0
    %1095 = vmatprep.subr.mxu0 0.0
    %1096 = vmatpush1.msra.mxu0 0.0
    %1097 = vmatprep.subr.mxu0 0.0
    %1098 = vmatpush1.msra.mxu0 0.0
    %1099 = vmatprep.subr.mxu0 0.0
    %1100 = vmatpush1.msra.mxu0 0.0
    %1101 = vmatprep.subr.mxu0 0.0
    %1102 = vmatpush1.msra.mxu0 0.0
    %1103 = vmatprep.subr.mxu0 0.0
    %1104 = vmatpush1.msra.mxu0 0.0
    %1105 = vmatprep.subr.mxu0 0.0
    %1106 = vmatpush1.msra.mxu0 0.0
    %1107 = vmatprep.subr.mxu0 0.0
    %1108 = vmatpush1.msra.mxu0 0.0
    %1109 = vmatprep.subr.mxu0 0.0
    %1110 = vmatpush1.msra.mxu0 0.0
    %1111 = vmatprep.subr.mxu0 0.0
    %1112 = vmatpush1.msra.mxu0 0.0
    %1113 = vmatprep.subr.mxu0 0.0
    %1114 = vmatpush1.msra.mxu0 0.0
    %1115 = vmatprep.subr.mxu0 0.0
    %1116 = vmatpush1.msra.mxu0 0.0
    %1117 = vmatprep.subr.mxu0 0.0
    %1118 = vmatpush1.msra.mxu0 0.0
    %1119 = vmatprep.subr.mxu0 0.0
    %1120 = vmatpush1.msra.mxu0 0.0
    %1121 = vmatprep.subr.mxu0 %v131
    %1122 = vmatpush1.msra.mxu0 %v130
    %1123 = vmatprep.subr.mxu0 0.0
    %1124 = vmatpush2.msra.mxu0 0.0
    %1125 = vmatprep.subr.mxu0 0.0
    %1126 = vmatpush2.msra.mxu0 0.0
    %1127 = vmatprep.subr.mxu0 0.0
    %1128 = vmatpush2.msra.mxu0 0.0
    %1129 = vmatprep.subr.mxu0 0.0
    %1130 = vmatpush2.msra.mxu0 0.0
    %1131 = vmatprep.subr.mxu0 0.0
    %1132 = vmatpush2.msra.mxu0 0.0
    %1133 = vmatprep.subr.mxu0 0.0
    %1134 = vmatpush2.msra.mxu0 0.0
    %1135 = vmatprep.subr.mxu0 0.0
    %1136 = vmatpush2.msra.mxu0 0.0
    %1137 = vmatprep.subr.mxu0 0.0
    %1138 = vmatpush2.msra.mxu0 0.0
    %1139 = vmatprep.subr.mxu0 0.0
    %1140 = vmatpush2.msra.mxu0 0.0
    %1141 = vmatprep.subr.mxu0 0.0
    %1142 = vmatpush2.msra.mxu0 0.0
    %1143 = vmatprep.subr.mxu0 0.0
    %1144 = vmatpush2.msra.mxu0 0.0
    %1145 = vmatprep.subr.mxu0 0.0
    %1146 = vmatpush2.msra.mxu0 0.0
    %1147 = vmatprep.subr.mxu0 0.0
    %1148 = vmatpush2.msra.mxu0 0.0
    %1149 = vmatprep.subr.mxu0 0.0
    %1150 = vmatpush2.msra.mxu0 0.0
    %1151 = vmatprep.subr.mxu0 0.0
    %1152 = vmatpush2.msra.mxu0 0.0
    %1153 = vmatprep.subr.mxu0 0.0
    %1154 = vmatpush2.msra.mxu0 0.0
    %1155 = vmatprep.mubr.f32.mxu0 0.0
    %1156 = vmatmul.mubr.f32.gmra.mxu0 %v1018
    %v1157 = vpop.f32.mrf.mxu0
    %v1158 = vadd.f32 0.0, %v1157
    %v1159 = vpop.f32.mrf.mxu0
    %v1160 = vadd.f32 0.0, %v1159
    %1161 = vdwg.mxu0
    %v1162 = vadd.f32 %v975, %v1087
    %v1163 = vadd.f32 %v976, %v1089
    %v1164 = vadd.f32 %v1013, %v1158
    %v1165 = vadd.f32 %v1014, %v1160
    %v1166 = vmax.f32 %v1162, 0.0
    %v1167 = vmax.f32 %v1163, 0.0
    %v1168 = vmax.f32 %v1164, 0.0
    %v1169 = vmax.f32 %v1165, 0.0
    %1170 = vst [vmem:[#allocation16] sm:$0xff] %v1166
    %1171 = vst [vmem:[#allocation16 + $0x8] sm:$0xff] %v1167
    %1172 = vst [vmem:[#allocation16 + $0x10] sm:$0xff] %v1168
    %1173 = vst [vmem:[#allocation16 + $0x18] sm:$0xff] %v1169
    // Predicated region
    $region70: #{tpu_custom_call.1} parent=1 // pred_check
      _
    $region71: #{tpu_custom_call.1} parent=1 // pred_check_branch
      %1175 = sbr.rel (0) target = $region73
    $region72: #{tpu_custom_call.1} parent=1 // pred_region
      %s1177 = ssub.s32 512, 512
      %1178 = vsyncadd [#allocation4], %s1177
      %s1180 = sshll.u32 [#allocation16], 4
      %s1181 = int_to_ptr.vmem [resolvable:$true] %s1180
      %1183 = dma.vmem_to_hbm [thread:$0]  %s1181, 512, %s9, [#allocation4]
    $region73: #{tpu_custom_call.1} parent=1 // pred_fallthru
      _
    // Predicated region
    $region74: #{tpu_custom_call.1} parent=1 // pred_check
      _
    $region75: #{tpu_custom_call.1} parent=1 // pred_check_branch
      %1185 = sbr.rel (0) target = $region77
    $region76: #{tpu_custom_call.1} parent=1 // pred_region
      %1186 = dma.done [#allocation4], 512
    $region77: #{tpu_custom_call.1} parent=1 // pred_fallthru
      _
    %1187 = vsyncpa [#allocation3], 1
    %1188 = vsyncpa [#allocation6], 1
    %1189 = vsyncpa [#allocation9], 1
    %1190 = vsyncpa [#allocation12], 1
    %1191 = vsyncpa [#allocation15], 1
    %1192 = vsyncpa [#allocation4], 1

</llo_original>
